<compile_context>
chip_gen: v7x
topology: tpu7x:2x2x1
jax: 0.10.0
libtpu: 0.0.40
codegen_flags: <defaults>
</compile_context>

<pallas_src>
import math

import jax
import jax.numpy as jnp
from jax.experimental import pallas as pl
from jax.experimental.pallas import tpu as pltpu


def _round_up(x, m):
    return ((x + m - 1) // m) * m


def mlp3_kernel(x_ref, w1_ref, w2_ref, w3_ref, b_ref, o_ref):
    """One batch tile of relu(x@W1+b1) -> relu(.@W2+b2) -> .@W3+b3.

    x_ref is f32 (cast to bf16 in-kernel); W refs are bf16; accumulation and
    the elementwise epilogue are f32.  b_ref is a packed (3, max(H, A)) f32
    tile: row 0 = b1, row 1 = b2, row 2 = b3 (each zero-padded on the right).
    """
    H = w1_ref.shape[1]
    A = o_ref.shape[1]

    x = x_ref[...].astype(jnp.bfloat16)

    # fc1 + relu
    h1 = jnp.dot(x, w1_ref[...], preferred_element_type=jnp.float32)
    h1 = jnp.maximum(h1 + b_ref[0:1, :H], 0.0)

    # fc2 + relu  (re-quantize activations to bf16 for the MXU)
    h2 = jnp.dot(h1.astype(jnp.bfloat16), w2_ref[...],
                 preferred_element_type=jnp.float32)
    h2 = jnp.maximum(h2 + b_ref[1:2, :H], 0.0)

    # fc3 (no activation)
    out = jnp.dot(h2.astype(jnp.bfloat16), w3_ref[...],
                  preferred_element_type=jnp.float32)
    # TODO(synk): with A=4 this is a masked 4/128-lane store; if the head ever
    # widens (or several heads/timesteps get fused into the last dim), repack
    # the output lane-dense ((tb, A) -> (tb//32, 32*A)).  Skipped here: the
    # in-kernel relayout has Mosaic-lowering risk across versions and the
    # output is only 16 B/row at A=4 (the kernel is launch-bound, not
    # store-bound).
    o_ref[...] = (out + b_ref[2:3, :A]).astype(o_ref.dtype)


def prepare_params(params):
    """One-time parameter prep. Keep OUTSIDE the per-step jitted forward.

    Casts the weights to bf16 (MXU operand dtype) and packs the three bias
    rows into a single (3, max(H, A)) f32 tile so the per-call hot path passes
    ready arrays and launches no cast / scatter ops.
    """
    w1, b1, w2, b2, w3, b3 = params
    H = w1.shape[1]
    A = w3.shape[1]
    W = max(H, A)  # robust even if n_actions ever exceeds the hidden width
    bias_pack = jnp.zeros((3, W), jnp.float32)
    bias_pack = bias_pack.at[0, :H].set(b1[0])
    bias_pack = bias_pack.at[1, :H].set(b2[0])
    bias_pack = bias_pack.at[2, :A].set(b3[0])
    return dict(
        w1=w1.astype(jnp.bfloat16),
        w2=w2.astype(jnp.bfloat16),
        w3=w3.astype(jnp.bfloat16),
        bias_pack=bias_pack,
        # f32 biases kept for the small-batch XLA fallback path.
        b1=b1, b2=b2, b3=b3,
    )


def _mlp3_xla(x, prep):
    """Small-batch path: XLA's fused dot chain beats pallas_call fixed cost."""
    bf = jnp.bfloat16
    h1 = jnp.dot(x.astype(bf), prep["w1"], preferred_element_type=jnp.float32)
    h1 = jnp.maximum(h1 + prep["b1"], 0.0)
    h2 = jnp.dot(h1.astype(bf), prep["w2"], preferred_element_type=jnp.float32)
    h2 = jnp.maximum(h2 + prep["b2"], 0.0)
    return jnp.dot(h2.astype(bf), prep["w3"],
                   preferred_element_type=jnp.float32) + prep["b3"]


def _choose_batch_tile(B, batch_tile):
    # >=2 grid steps whenever possible so dimension_semantics=("parallel",)
    # can shard the batch across v7x's 2 TensorCores; otherwise the largest
    # tile (<= batch_tile) to amortize the ~0.35us per-grid-step overhead on
    # the single-TensorCore v5e/v6e.
    tb = _round_up(max(pl.cdiv(B, 2), 16), 16)
    return min(tb, batch_tile)


def generic_network_forward(x, prep, *, batch_tile=2048, min_kernel_batch=256):
    """3-layer MLP forward.  `prep` must come from prepare_params()."""
    B, d_in = x.shape
    H = prep["w1"].shape[1]
    A = prep["w3"].shape[1]

    if B < min_kernel_batch:
        # Tiny batches (the original single-observation use case): pallas_call
        # fixed cost dominates, so use plain XLA with identical bf16 numerics.
        return _mlp3_xla(x, prep)

    tb = _choose_batch_tile(B, batch_tile)
    grid = (pl.cdiv(B, tb),)  # last block may be partial -> masked writes

    flops = 2 * B * (d_in * H + H * H + H * A)
    bytes_accessed = (
        x.size * 4
        + (prep["w1"].size + prep["w2"].size + prep["w3"].size) * 2
        + prep["bias_pack"].size * 4
        + B * A * 4
    )

    # NOTE: the four resident operands (W1/W2/W3/bias_pack) could be marked
    # single-buffered via pipeline_mode=pl.Buffered(1); skipped because they
    # total <10 KB so the VMEM saved is negligible and buffer_count=1 support
    # varies across jax versions.
    return pl.pallas_call(
        mlp3_kernel,
        out_shape=jax.ShapeDtypeStruct((B, A), jnp.float32),
        grid=grid,
        in_specs=[
            pl.BlockSpec((tb, d_in), lambda i: (i, 0)),              # x: streamed (f32)
            pl.BlockSpec(prep["w1"].shape, lambda i: (0, 0)),        # W1: resident
            pl.BlockSpec(prep["w2"].shape, lambda i: (0, 0)),        # W2: resident
            pl.BlockSpec(prep["w3"].shape, lambda i: (0, 0)),        # W3: resident
            pl.BlockSpec(prep["bias_pack"].shape, lambda i: (0, 0)),  # biases: resident
        ],
        out_specs=pl.BlockSpec((tb, A), lambda i: (i, 0)),
        compiler_params=pltpu.CompilerParams(
            # batch tiles are independent -> shard across v7x's 2 TensorCores
            dimension_semantics=("parallel",),
        ),
        cost_estimate=pl.CostEstimate(
            flops=flops, transcendentals=0, bytes_accessed=bytes_accessed),
    )(x, prep["w1"], prep["w2"], prep["w3"], prep["bias_pack"])


def init_linear(key, fan_in, fan_out):
    """Deterministic init matching torch.nn.Linear default (uniform ±1/sqrt(fan_in)).

    Returns weight as (in, out) — already transposed for x @ W.
    """
    kw, kb = jax.random.split(key)
    bound = 1.0 / math.sqrt(fan_in)
    w = jax.random.uniform(kw, (fan_in, fan_out), jnp.float32, -bound, bound)
    b = jax.random.uniform(kb, (1, fan_out), jnp.float32, -bound, bound)
    return w, b


def build_params(key, input_dim, fc1_dims, fc2_dims, n_actions):
    # Module quirk: fc1Dims = fc2Dims = fc2_dims (fc1_dims unused).
    del fc1_dims
    h = fc2_dims
    k1, k2, k3 = jax.random.split(key, 3)
    w1, b1 = init_linear(k1, input_dim, h)
    w2, b2 = init_linear(k2, h, h)
    w3, b3 = init_linear(k3, h, n_actions)
    return (w1, b1, w2, b2, w3, b3)


def reference_forward_f32(x, params):
    """Pure f32 reference (exact module math)."""
    w1, b1, w2, b2, w3, b3 = params
    h1 = jnp.maximum(x @ w1 + b1, 0.0)
    h2 = jnp.maximum(h1 @ w2 + b2, 0.0)
    return h2 @ w3 + b3


def reference_forward_bf16(x, params):
    """Reference matching the kernel numerics: bf16 operands, f32 accumulate."""
    w1, b1, w2, b2, w3, b3 = params
    bf = jnp.bfloat16
    h1 = jnp.dot(x.astype(bf), w1.astype(bf), preferred_element_type=jnp.float32)
    h1 = jnp.maximum(h1 + b1, 0.0)
    h2 = jnp.dot(h1.astype(bf), w2.astype(bf), preferred_element_type=jnp.float32)
    h2 = jnp.maximum(h2 + b2, 0.0)
    return jnp.dot(h2.astype(bf), w3.astype(bf),
                   preferred_element_type=jnp.float32) + b3


if __name__ == "__main__":
    key = jax.random.PRNGKey(0)
    kx, kx2, kx3, kp = jax.random.split(key, 4)

    input_dim = 8        # input_dims = (8,)
    fc1_dims = 32        # ignored by the module (quirk)
    fc2_dims = 32
    n_actions = 4
    params = build_params(kp, input_dim, fc1_dims, fc2_dims, n_actions)

    # One-time prep (bf16 weights + packed biases) OUTSIDE the jitted forward.
    prep = prepare_params(params)

    fwd = jax.jit(generic_network_forward)

    # Case 1: rollout-sized batch -> Pallas kernel path. tb=512, 2 grid steps,
    # second block partial (488 valid rows, masked writes), weights resident.
    batch = 1000
    x = jax.random.normal(kx, (batch, input_dim), jnp.float32)
    out = jax.block_until_ready(fwd(x, prep))
    assert out.shape == (batch, n_actions)
    ref_bf16 = reference_forward_bf16(x, params)
    ref_f32 = reference_forward_f32(x, params)
    assert jnp.allclose(out, ref_bf16, atol=1e-3, rtol=1e-3), \
        "mismatch vs bf16-matched reference"
    # loose sanity bound vs full-precision module math (bf16 operand rounding)
    assert jnp.allclose(out, ref_f32, atol=0.15, rtol=0.05), \
        "mismatch vs f32 reference beyond bf16 rounding budget"

    # Case 2: the original tiny batch -> small-batch XLA fallback path.
    batch_small = 8
    x_small = jax.random.normal(kx2, (batch_small, input_dim), jnp.float32)
    out_small = jax.block_until_ready(fwd(x_small, prep))
    assert out_small.shape == (batch_small, n_actions)
    assert jnp.allclose(out_small, reference_forward_bf16(x_small, params),
                        atol=1e-3, rtol=1e-3), "small-batch mismatch"

    # Case 3: force the kernel at a modest batch (exactly-divisible grid,
    # >=2 tiles so both v7x TensorCores would get work).
    batch_mid = 512
    x_mid = jax.random.normal(kx3, (batch_mid, input_dim), jnp.float32)
    fwd_force = jax.jit(
        lambda a, p: generic_network_forward(a, p, min_kernel_batch=1))
    out_mid = jax.block_until_ready(fwd_force(x_mid, prep))
    assert out_mid.shape == (batch_mid, n_actions)
    assert jnp.allclose(out_mid, reference_forward_bf16(x_mid, params),
                        atol=1e-3, rtol=1e-3), "mid-batch mismatch"

    print("KERNEL_OK")
</pallas_src>

<mosaic_0001>
module attributes {stable_mosaic.version = 11 : i64} {
  func.func @mlp3_kernel(%arg0: i32, %arg1: memref<512x8xf32, #tpu.memory_space<vmem>>, %arg2: memref<8x32xbf16, #tpu.memory_space<vmem>>, %arg3: memref<32x32xbf16, #tpu.memory_space<vmem>>, %arg4: memref<32x4xbf16, #tpu.memory_space<vmem>>, %arg5: memref<3x32xf32, #tpu.memory_space<vmem>>, %arg6: memref<512x4xf32, #tpu.memory_space<vmem>>) attributes {dimension_semantics = [#tpu.dimension_semantics<parallel>], iteration_bounds = array<i64: 2>, scalar_prefetch = 0 : i64, scratch_operands = 0 : i64, tpu.core_type = #tpu.core_type<tc>, window_params = [{transform_indices = @transform_0, window_bounds = array<i64: 512, 8>}, {pipeline_mode = #tpu.pipeline_mode<synchronous>, transform_indices = @transform_1, window_bounds = array<i64: 8, 32>}, {pipeline_mode = #tpu.pipeline_mode<synchronous>, transform_indices = @transform_2, window_bounds = array<i64: 32, 32>}, {pipeline_mode = #tpu.pipeline_mode<synchronous>, transform_indices = @transform_3, window_bounds = array<i64: 32, 4>}, {pipeline_mode = #tpu.pipeline_mode<synchronous>, transform_indices = @transform_4, window_bounds = array<i64: 3, 32>}, {transform_indices = @transform_5, window_bounds = array<i64: 512, 4>}]} {
    %c0 = arith.constant 0 : index
    %c0_0 = arith.constant 0 : index
    %0 = vector.load %arg1[%c0, %c0_0] : memref<512x8xf32, #tpu.memory_space<vmem>>, vector<512x8xf32>
    %1 = arith.truncf %0 : vector<512x8xf32> to vector<512x8xbf16>
    %c0_1 = arith.constant 0 : index
    %c0_2 = arith.constant 0 : index
    %2 = vector.load %arg2[%c0_1, %c0_2] : memref<8x32xbf16, #tpu.memory_space<vmem>>, vector<8x32xbf16>
    %cst = arith.constant dense<0.000000e+00> : vector<512x32xf32>
    %3 = tpu.matmul %1, %2, %cst {dimension_numbers = #tpu.dot_dimension_numbers<[1], [0], [0], [1], [0, 0, 1, 1], [], []>} : vector<512x8xbf16>, vector<8x32xbf16>, vector<512x32xf32> -> vector<512x32xf32>
    %c0_3 = arith.constant 0 : index
    %c0_4 = arith.constant 0 : index
    %4 = vector.load %arg5[%c0_3, %c0_4] : memref<3x32xf32, #tpu.memory_space<vmem>>, vector<1x32xf32>
    %5 = vector.broadcast %4 : vector<1x32xf32> to vector<512x32xf32>
    %6 = arith.addf %3, %5 : vector<512x32xf32>
    %cst_5 = arith.constant 0.000000e+00 : f32
    %7 = vector.broadcast %cst_5 : f32 to vector<512x32xf32>
    %8 = arith.maximumf %6, %7 : vector<512x32xf32>
    %9 = arith.truncf %8 : vector<512x32xf32> to vector<512x32xbf16>
    %c0_6 = arith.constant 0 : index
    %c0_7 = arith.constant 0 : index
    %10 = vector.load %arg3[%c0_6, %c0_7] : memref<32x32xbf16, #tpu.memory_space<vmem>>, vector<32x32xbf16>
    %cst_8 = arith.constant dense<0.000000e+00> : vector<512x32xf32>
    %11 = tpu.matmul %9, %10, %cst_8 {dimension_numbers = #tpu.dot_dimension_numbers<[1], [0], [0], [1], [0, 0, 1, 1], [], []>} : vector<512x32xbf16>, vector<32x32xbf16>, vector<512x32xf32> -> vector<512x32xf32>
    %c1 = arith.constant 1 : index
    %c0_9 = arith.constant 0 : index
    %12 = vector.load %arg5[%c1, %c0_9] : memref<3x32xf32, #tpu.memory_space<vmem>>, vector<1x32xf32>
    %13 = vector.broadcast %12 : vector<1x32xf32> to vector<512x32xf32>
    %14 = arith.addf %11, %13 : vector<512x32xf32>
    %cst_10 = arith.constant 0.000000e+00 : f32
    %15 = vector.broadcast %cst_10 : f32 to vector<512x32xf32>
    %16 = arith.maximumf %14, %15 : vector<512x32xf32>
    %17 = arith.truncf %16 : vector<512x32xf32> to vector<512x32xbf16>
    %c0_11 = arith.constant 0 : index
    %c0_12 = arith.constant 0 : index
    %18 = vector.load %arg4[%c0_11, %c0_12] : memref<32x4xbf16, #tpu.memory_space<vmem>>, vector<32x4xbf16>
    %cst_13 = arith.constant dense<0.000000e+00> : vector<512x4xf32>
    %19 = tpu.matmul %17, %18, %cst_13 {dimension_numbers = #tpu.dot_dimension_numbers<[1], [0], [0], [1], [0, 0, 1, 1], [], []>} : vector<512x32xbf16>, vector<32x4xbf16>, vector<512x4xf32> -> vector<512x4xf32>
    %c2 = arith.constant 2 : index
    %c0_14 = arith.constant 0 : index
    %20 = vector.load %arg5[%c2, %c0_14] : memref<3x32xf32, #tpu.memory_space<vmem>>, vector<1x4xf32>
    %21 = vector.broadcast %20 : vector<1x4xf32> to vector<512x4xf32>
    %22 = arith.addf %19, %21 : vector<512x4xf32>
    %c0_15 = arith.constant 0 : index
    %c0_16 = arith.constant 0 : index
    %23 = vector.load %arg6[%c0_15, %c0_16] : memref<512x4xf32, #tpu.memory_space<vmem>>, vector<512x4xf32>
    tpu.vector_store %arg6[%c0_15, %c0_16], %22 {strides = array<i32>} : memref<512x4xf32, #tpu.memory_space<vmem>>, vector<512x4xf32>,
    return
  }
  func.func @transform_0(%arg0: i32) -> (i32, i32) {
    %c0_i32 = arith.constant 0 : i32
    %c0_i32_0 = arith.constant 0 : i32
    return %arg0, %c0_i32 : i32, i32
  }
  func.func @transform_1(%arg0: i32) -> (i32, i32) {
    %c0_i32 = arith.constant 0 : i32
    %c0_i32_0 = arith.constant 0 : i32
    %c0_i32_1 = arith.constant 0 : i32
    return %c0_i32, %c0_i32_0 : i32, i32
  }
  func.func @transform_2(%arg0: i32) -> (i32, i32) {
    %c0_i32 = arith.constant 0 : i32
    %c0_i32_0 = arith.constant 0 : i32
    %c0_i32_1 = arith.constant 0 : i32
    return %c0_i32, %c0_i32_0 : i32, i32
  }
  func.func @transform_3(%arg0: i32) -> (i32, i32) {
    %c0_i32 = arith.constant 0 : i32
    %c0_i32_0 = arith.constant 0 : i32
    %c0_i32_1 = arith.constant 0 : i32
    return %c0_i32, %c0_i32_0 : i32, i32
  }
  func.func @transform_4(%arg0: i32) -> (i32, i32) {
    %c0_i32 = arith.constant 0 : i32
    %c0_i32_0 = arith.constant 0 : i32
    %c0_i32_1 = arith.constant 0 : i32
    return %c0_i32, %c0_i32_0 : i32, i32
  }
  func.func @transform_5(%arg0: i32) -> (i32, i32) {
    %c0_i32 = arith.constant 0 : i32
    %c0_i32_0 = arith.constant 0 : i32
    return %arg0, %c0_i32 : i32, i32
  }
}

</mosaic_0001>

<llo_original>
// kernel: generic_network_forward.1
$region0: #{generic_network_forward.1}
  #allocation0 [shape = 'u32[]', space=smem, size = 0x4, offset = 0x4, fixed_abs, tag = 'smem constant byte address 0x4 - core index']
  #allocation1 [shape = 'u32[144,128]{1,0:T(1,128)}', space=vmem, size = 0x12000, scoped, tag = 'internal scratch']
  %s0 = inlined_call_operand.vmem [shape: f32[1000,8], index: 0, kind: input, shape index: {}]
  %s1 = inlined_call_operand.vmem [shape: bf16[8,32], index: 1, kind: input, shape index: {}]
  %s2 = inlined_call_operand.vmem [shape: bf16[32,32], index: 2, kind: input, shape index: {}]
  %s3 = inlined_call_operand.vmem [shape: bf16[32,4], index: 3, kind: input, shape index: {}]
  %s4 = inlined_call_operand.vmem [shape: f32[3,32], index: 4, kind: input, shape index: {}]
  %s5 = inlined_call_operand.vmem [shape: f32[1000,4], index: 5, kind: output, shape index: {}]
  %s6 = sld [smem:[#allocation0]]
  $region101: #{generic_network_forward.1} parent=0
    _
  %s8 = ssub.s32 1, %s6
  %s9 = scalar_select 0, %s8, %s6
  $region1: #{generic_network_forward.1} parent=0
    #allocation2 [shape = 'u8[524288]{0}', space=vmem, size = 0x80000, scoped, tag = 'output window, operand 0']
    loop: start=0, step=1, limit=4
    $region2: #{generic_network_forward.1} parent=1 // loop_pre_header
      _
    $region3: #{generic_network_forward.1} parent=1 // loop_header
      %s11 = sphi 0, %s15
      %p12 = scmp.ge.s32.totalorder %s11, 4
      %s21 = sphi 0, %s23
      %s24 = sphi 0, %s21
      %s25 = sphi 0, %s24
      %s41 = sphi 0, %s25
      %s45 = sphi 0, %s45
      %s47 = sphi 0, %s45
      %s48 = sphi 0, %s47
      %s62 = sphi 0, %s48
      %s66 = sphi 0, %s66
      %s68 = sphi 0, %s66
      %s69 = sphi 0, %s68
      %s83 = sphi 0, %s69
      %s87 = sphi 0, %s87
      %s89 = sphi 0, %s87
      %s90 = sphi 0, %s89
      %s104 = sphi 0, %s90
      %s108 = sphi 0, %s108
      %s110 = sphi 0, %s108
      %s111 = sphi 0, %s110
      %s125 = sphi 0, %s111
      %s131 = sphi 0, %s133
      %s134 = sphi 0, %s131
      %s135 = sphi 0, %s134
      %s151 = sphi 0, %s135
    $region4: #{generic_network_forward.1} parent=1 // loop_header_branch
      %14 = sbr.rel (%p12) target = $region8
    $region5: #{generic_network_forward.1} parent=1 // loop_body
      %s16 = ssub.s32 %s11, 1
      %s17 = ssub.s32 %s11, 2
      %s18 = sadd.s32 %s11, 1
      %s19 = ssub.s32 %s11, %s18
      %p20 = scmp.eq.s32.totalorder %s19, 0
      %s22 = sadd.s32 %s21, 1
      %s23 = scalar_select %p20, %s21, %s22
      %p26 = pneg %p20
      %p27 = scmp.eq.s32.totalorder %s11, 1
      %p28 = por %p26, %p27
      %p29 = scmp.ne.s32.totalorder %s21, %s24
      %p30 = scmp.eq.s32.totalorder %s11, 0
      %p31 = por %p29, %p30
      %p32 = scmp.ne.s32.totalorder %s21, %s24
      %p33 = scmp.eq.s32.totalorder %s16, 1
      %p34 = por %p32, %p33
      %p35 = scmp.ne.s32.totalorder %s24, %s25
      %p36 = scmp.eq.s32.totalorder %s16, 0
      %p37 = por %p35, %p36
      %p38 = scmp.ne.s32.totalorder %s24, %s25
      %p39 = scmp.eq.s32.totalorder %s17, 1
      %p40 = por %p38, %p39
      %p42 = scmp.ne.s32.totalorder %s25, %s41
      %p43 = scmp.eq.s32.totalorder %s17, 0
      %p44 = por %p42, %p43
      %s46 = sadd.s32 %s45, 1
      %p49 = scmp.eq.s32.totalorder %s11, 1
      %p50 = scmp.ne.s32.totalorder %s45, %s47
      %p51 = scmp.eq.s32.totalorder %s11, 0
      %p52 = por %p50, %p51
      %p53 = scmp.ne.s32.totalorder %s45, %s47
      %p54 = scmp.eq.s32.totalorder %s16, 1
      %p55 = por %p53, %p54
      %p56 = scmp.ne.s32.totalorder %s47, %s48
      %p57 = scmp.eq.s32.totalorder %s16, 0
      %p58 = por %p56, %p57
      %p59 = scmp.ne.s32.totalorder %s47, %s48
      %p60 = scmp.eq.s32.totalorder %s17, 1
      %p61 = por %p59, %p60
      %p63 = scmp.ne.s32.totalorder %s48, %s62
      %p64 = scmp.eq.s32.totalorder %s17, 0
      %p65 = por %p63, %p64
      %s67 = sadd.s32 %s66, 1
      %p70 = scmp.eq.s32.totalorder %s11, 1
      %p71 = scmp.ne.s32.totalorder %s66, %s68
      %p72 = scmp.eq.s32.totalorder %s11, 0
      %p73 = por %p71, %p72
      %p74 = scmp.ne.s32.totalorder %s66, %s68
      %p75 = scmp.eq.s32.totalorder %s16, 1
      %p76 = por %p74, %p75
      %p77 = scmp.ne.s32.totalorder %s68, %s69
      %p78 = scmp.eq.s32.totalorder %s16, 0
      %p79 = por %p77, %p78
      %p80 = scmp.ne.s32.totalorder %s68, %s69
      %p81 = scmp.eq.s32.totalorder %s17, 1
      %p82 = por %p80, %p81
      %p84 = scmp.ne.s32.totalorder %s69, %s83
      %p85 = scmp.eq.s32.totalorder %s17, 0
      %p86 = por %p84, %p85
      %s88 = sadd.s32 %s87, 1
      %p91 = scmp.eq.s32.totalorder %s11, 1
      %p92 = scmp.ne.s32.totalorder %s87, %s89
      %p93 = scmp.eq.s32.totalorder %s11, 0
      %p94 = por %p92, %p93
      %p95 = scmp.ne.s32.totalorder %s87, %s89
      %p96 = scmp.eq.s32.totalorder %s16, 1
      %p97 = por %p95, %p96
      %p98 = scmp.ne.s32.totalorder %s89, %s90
      %p99 = scmp.eq.s32.totalorder %s16, 0
      %p100 = por %p98, %p99
      %p101 = scmp.ne.s32.totalorder %s89, %s90
      %p102 = scmp.eq.s32.totalorder %s17, 1
      %p103 = por %p101, %p102
      %p105 = scmp.ne.s32.totalorder %s90, %s104
      %p106 = scmp.eq.s32.totalorder %s17, 0
      %p107 = por %p105, %p106
      %s109 = sadd.s32 %s108, 1
      %p112 = scmp.eq.s32.totalorder %s11, 1
      %p113 = scmp.ne.s32.totalorder %s108, %s110
      %p114 = scmp.eq.s32.totalorder %s11, 0
      %p115 = por %p113, %p114
      %p116 = scmp.ne.s32.totalorder %s108, %s110
      %p117 = scmp.eq.s32.totalorder %s16, 1
      %p118 = por %p116, %p117
      %p119 = scmp.ne.s32.totalorder %s110, %s111
      %p120 = scmp.eq.s32.totalorder %s16, 0
      %p121 = por %p119, %p120
      %p122 = scmp.ne.s32.totalorder %s110, %s111
      %p123 = scmp.eq.s32.totalorder %s17, 1
      %p124 = por %p122, %p123
      %p126 = scmp.ne.s32.totalorder %s111, %s125
      %p127 = scmp.eq.s32.totalorder %s17, 0
      %p128 = por %p126, %p127
      %s129 = ssub.s32 %s11, %s18
      %p130 = scmp.eq.s32.totalorder %s129, 0
      %s132 = sadd.s32 %s131, 1
      %s133 = scalar_select %p130, %s131, %s132
      %p136 = pneg %p130
      %p137 = scmp.eq.s32.totalorder %s11, 1
      %p138 = por %p136, %p137
      %p139 = scmp.ne.s32.totalorder %s131, %s134
      %p140 = scmp.eq.s32.totalorder %s11, 0
      %p141 = por %p139, %p140
      %p142 = scmp.ne.s32.totalorder %s131, %s134
      %p143 = scmp.eq.s32.totalorder %s16, 1
      %p144 = por %p142, %p143
      %p145 = scmp.ne.s32.totalorder %s134, %s135
      %p146 = scmp.eq.s32.totalorder %s16, 0
      %p147 = por %p145, %p146
      %p148 = scmp.ne.s32.totalorder %s134, %s135
      %p149 = scmp.eq.s32.totalorder %s17, 1
      %p150 = por %p148, %p149
      %p152 = scmp.ne.s32.totalorder %s135, %s151
      %p153 = scmp.eq.s32.totalorder %s17, 0
      %p154 = por %p152, %p153
      %p155 = scmp.le.s32.totalorder 1, %s11
      %p156 = scmp.lt.s32.totalorder %s11, 3
      %p157 = pnand %p155, %p156
      %p158 = pneg %p157
      // Predicated region
      $region9: #{generic_network_forward.1} parent=5 // pred_check
        _
      $region10: #{generic_network_forward.1} parent=5 // pred_check_branch
        %160 = sbr.rel (%p157) target = $region12
      $region11: #{generic_network_forward.1} parent=5 // pred_region
        %s161 = ssub.s32 %s11, 1
        // Predicated region
        $region13: #{generic_network_forward.1} parent=11 // pred_check
          %p162 = pneg %p58
        $region14: #{generic_network_forward.1} parent=11 // pred_check_branch
          %164 = sbr.rel (%p162) target = $region16
        $region15: #{generic_network_forward.1} parent=11 // pred_region
          _
        $region16: #{generic_network_forward.1} parent=11 // pred_fallthru
          _
        // Predicated region
        $region17: #{generic_network_forward.1} parent=11 // pred_check
          %p165 = pneg %p79
        $region18: #{generic_network_forward.1} parent=11 // pred_check_branch
          %167 = sbr.rel (%p165) target = $region20
        $region19: #{generic_network_forward.1} parent=11 // pred_region
          _
        $region20: #{generic_network_forward.1} parent=11 // pred_fallthru
          _
        // Predicated region
        $region21: #{generic_network_forward.1} parent=11 // pred_check
          %p168 = pneg %p100
        $region22: #{generic_network_forward.1} parent=11 // pred_check_branch
          %170 = sbr.rel (%p168) target = $region24
        $region23: #{generic_network_forward.1} parent=11 // pred_region
          _
        $region24: #{generic_network_forward.1} parent=11 // pred_fallthru
          _
        // Predicated region
        $region25: #{generic_network_forward.1} parent=11 // pred_check
          %p171 = pneg %p121
        $region26: #{generic_network_forward.1} parent=11 // pred_check_branch
          %173 = sbr.rel (%p171) target = $region28
        $region27: #{generic_network_forward.1} parent=11 // pred_region
          _
        $region28: #{generic_network_forward.1} parent=11 // pred_fallthru
          _
      $region12: #{generic_network_forward.1} parent=5 // pred_fallthru
        _
      %p174 = scmp.lt.s32.totalorder %s11, 2
      // Predicated region
      $region29: #{generic_network_forward.1} parent=5 // pred_check
        %p175 = pneg %p174
      $region30: #{generic_network_forward.1} parent=5 // pred_check_branch
        %177 = sbr.rel (%p175) target = $region32
      $region31: #{generic_network_forward.1} parent=5 // pred_region
        // Predicated region
        $region33: #{generic_network_forward.1} parent=31 // pred_check
          %p178 = pneg %p31
        $region34: #{generic_network_forward.1} parent=31 // pred_check_branch
          %180 = sbr.rel (%p178) target = $region36
        $region35: #{generic_network_forward.1} parent=31 // pred_region
          %s181 = smul.u32 64, %s11
          %s182 = ssub.s32 125, %s181
          %p183 = scmp.lt.s32.totalorder %s182, 64
          %s184 = scalar_select %p183, %s182, 64
          %s185 = smul.u32 128, %s184
          %p186 = scmp.lt.s32.totalorder %s181, 124
          %s187 = scalar_select %p186, %s181, 124
          %s188 = smul.addr %s187, 8
          %s189 = scalar_lea.vmem %s0, %s188
          %s190 = smul.u32 64, %s11
          %s191 = ssub.s32 125, %s190
          %p192 = scmp.lt.s32.totalorder %s191, 64
          %s193 = scalar_select %p192, %s191, 64
          %s194 = smul.u32 128, %s193
        $region36: #{generic_network_forward.1} parent=31 // pred_fallthru
          _
      $region32: #{generic_network_forward.1} parent=5 // pred_fallthru
        _
      %p195 = scmp.le.s32.totalorder 1, %s11
      %p196 = scmp.lt.s32.totalorder %s11, 3
      %p197 = pnand %p195, %p196
      %p198 = pneg %p197
      // Predicated region
      $region37: #{generic_network_forward.1} parent=5 // pred_check
        _
      $region38: #{generic_network_forward.1} parent=5 // pred_check_branch
        %200 = sbr.rel (%p197) target = $region40
      $region39: #{generic_network_forward.1} parent=5 // pred_region
        %s201 = ssub.s32 %s11, 1
        %s202 = smul.u32 64, %s16
        %s203 = ssub.s32 125, %s202
        %p204 = scmp.lt.s32.totalorder %s203, 64
        %s205 = scalar_select %p204, %s203, 64
        %s206 = smul.u32 128, %s205
        %p207 = scmp.lt.s32.totalorder %s202, 124
        %s208 = scalar_select %p207, %s202, 124
        %s209 = smul.addr %s208, 8
        %s210 = scalar_lea.vmem %s0, %s209
        %p211 = pneg %p37
        %p212 = pneg %p34
        %p213 = pneg %p58
        %p214 = pneg %p55
        %p215 = pneg %p79
        %p216 = pneg %p76
        %p217 = pneg %p100
        %p218 = pneg %p97
        %p219 = pneg %p121
        %p220 = pneg %p118
        %p221 = pneg %p147
        %p222 = pneg %p144
        %s223 = sand.u32 %s134, 1
        %s224 = sand.u32 %s134, 1
        %s225 = smul.addr %s224, 512
        %s226 = scalar_lea.vmem [#allocation2], %s225
        %s227 = smul.u32 64, %s16
        %s228 = ssub.s32 125, %s227
        %p229 = scmp.lt.s32.totalorder %s228, 64
        %s230 = scalar_select %p229, %s228, 64
        %s231 = smul.u32 128, %s230
        %p232 = scmp.lt.s32.totalorder %s227, 124
        %s233 = scalar_select %p232, %s227, 124
        %s234 = smul.addr %s233, 8
        %s235 = scalar_lea.vmem %s0, %s234
        %s236 = smul.u32 64, %s16
        %s237 = ssub.s32 125, %s236
        %p238 = scmp.lt.s32.totalorder %s237, 64
        %s239 = scalar_select %p238, %s237, 64
        %s240 = smul.u32 128, %s239
        %s241 = smul.u32 64, %s16
        %s242 = ssub.s32 125, %s241
        %p243 = scmp.lt.s32.totalorder %s242, 64
        %s244 = scalar_select %p243, %s242, 64
        %s245 = smul.u32 128, %s244
        %v247 = vld [vmem:[%s235] sm:$0xff]
        %v248 = vld [vmem:[%s235 + $0x8] sm:$0xff]
        %v249 = vld [vmem:[%s235 + $0x10] sm:$0xff]
        %v250 = vld [vmem:[%s235 + $0x18] sm:$0xff]
        %v251 = vld [vmem:[%s235 + $0x20] sm:$0xff]
        %v252 = vld [vmem:[%s235 + $0x28] sm:$0xff]
        %v253 = vld [vmem:[%s235 + $0x30] sm:$0xff]
        %v254 = vld [vmem:[%s235 + $0x38] sm:$0xff]
        %v255 = vld [vmem:[%s235 + $0x40] sm:$0xff]
        %v256 = vld [vmem:[%s235 + $0x48] sm:$0xff]
        %v257 = vld [vmem:[%s235 + $0x50] sm:$0xff]
        %v258 = vld [vmem:[%s235 + $0x58] sm:$0xff]
        %v259 = vld [vmem:[%s235 + $0x60] sm:$0xff]
        %v260 = vld [vmem:[%s235 + $0x68] sm:$0xff]
        %v261 = vld [vmem:[%s235 + $0x70] sm:$0xff]
        %v262 = vld [vmem:[%s235 + $0x78] sm:$0xff]
        %v263 = vld [vmem:[%s235 + $0x80] sm:$0xff]
        %v264 = vld [vmem:[%s235 + $0x88] sm:$0xff]
        %v265 = vld [vmem:[%s235 + $0x90] sm:$0xff]
        %v266 = vld [vmem:[%s235 + $0x98] sm:$0xff]
        %v267 = vld [vmem:[%s235 + $0xa0] sm:$0xff]
        %v268 = vld [vmem:[%s235 + $0xa8] sm:$0xff]
        %v269 = vld [vmem:[%s235 + $0xb0] sm:$0xff]
        %v270 = vld [vmem:[%s235 + $0xb8] sm:$0xff]
        %v271 = vld [vmem:[%s235 + $0xc0] sm:$0xff]
        %v272 = vld [vmem:[%s235 + $0xc8] sm:$0xff]
        %v273 = vld [vmem:[%s235 + $0xd0] sm:$0xff]
        %v274 = vld [vmem:[%s235 + $0xd8] sm:$0xff]
        %v275 = vld [vmem:[%s235 + $0xe0] sm:$0xff]
        %v276 = vld [vmem:[%s235 + $0xe8] sm:$0xff]
        %v277 = vld [vmem:[%s235 + $0xf0] sm:$0xff]
        %v278 = vld [vmem:[%s235 + $0xf8] sm:$0xff]
        %v279 = vld [vmem:[%s235 + $0x100] sm:$0xff]
        %v280 = vld [vmem:[%s235 + $0x108] sm:$0xff]
        %v281 = vld [vmem:[%s235 + $0x110] sm:$0xff]
        %v282 = vld [vmem:[%s235 + $0x118] sm:$0xff]
        %v283 = vld [vmem:[%s235 + $0x120] sm:$0xff]
        %v284 = vld [vmem:[%s235 + $0x128] sm:$0xff]
        %v285 = vld [vmem:[%s235 + $0x130] sm:$0xff]
        %v286 = vld [vmem:[%s235 + $0x138] sm:$0xff]
        %v287 = vld [vmem:[%s235 + $0x140] sm:$0xff]
        %v288 = vld [vmem:[%s235 + $0x148] sm:$0xff]
        %v289 = vld [vmem:[%s235 + $0x150] sm:$0xff]
        %v290 = vld [vmem:[%s235 + $0x158] sm:$0xff]
        %v291 = vld [vmem:[%s235 + $0x160] sm:$0xff]
        %v292 = vld [vmem:[%s235 + $0x168] sm:$0xff]
        %v293 = vld [vmem:[%s235 + $0x170] sm:$0xff]
        %v294 = vld [vmem:[%s235 + $0x178] sm:$0xff]
        %v295 = vld [vmem:[%s235 + $0x180] sm:$0xff]
        %v296 = vld [vmem:[%s235 + $0x188] sm:$0xff]
        %v297 = vld [vmem:[%s235 + $0x190] sm:$0xff]
        %v298 = vld [vmem:[%s235 + $0x198] sm:$0xff]
        %v299 = vld [vmem:[%s235 + $0x1a0] sm:$0xff]
        %v300 = vld [vmem:[%s235 + $0x1a8] sm:$0xff]
        %v301 = vld [vmem:[%s235 + $0x1b0] sm:$0xff]
        %v302 = vld [vmem:[%s235 + $0x1b8] sm:$0xff]
        %v303 = vld [vmem:[%s235 + $0x1c0] sm:$0xff]
        %v304 = vld [vmem:[%s235 + $0x1c8] sm:$0xff]
        %v305 = vld [vmem:[%s235 + $0x1d0] sm:$0xff]
        %v306 = vld [vmem:[%s235 + $0x1d8] sm:$0xff]
        %v307 = vld [vmem:[%s235 + $0x1e0] sm:$0xff]
        %v308 = vld [vmem:[%s235 + $0x1e8] sm:$0xff]
        %v309 = vld [vmem:[%s235 + $0x1f0] sm:$0xff]
        %v310 = vld [vmem:[%s235 + $0x1f8] sm:$0xff]
        %v311 = vpack.c.bf16 %v248, %v247
        %v312 = vpack.c.bf16 %v250, %v249
        %v313 = vpack.c.bf16 %v252, %v251
        %v314 = vpack.c.bf16 %v254, %v253
        %v315 = vpack.c.bf16 %v256, %v255
        %v316 = vpack.c.bf16 %v258, %v257
        %v317 = vpack.c.bf16 %v260, %v259
        %v318 = vpack.c.bf16 %v262, %v261
        %v319 = vpack.c.bf16 %v264, %v263
        %v320 = vpack.c.bf16 %v266, %v265
        %v321 = vpack.c.bf16 %v268, %v267
        %v322 = vpack.c.bf16 %v270, %v269
        %v323 = vpack.c.bf16 %v272, %v271
        %v324 = vpack.c.bf16 %v274, %v273
        %v325 = vpack.c.bf16 %v276, %v275
        %v326 = vpack.c.bf16 %v278, %v277
        %v327 = vpack.c.bf16 %v280, %v279
        %v328 = vpack.c.bf16 %v282, %v281
        %v329 = vpack.c.bf16 %v284, %v283
        %v330 = vpack.c.bf16 %v286, %v285
        %v331 = vpack.c.bf16 %v288, %v287
        %v332 = vpack.c.bf16 %v290, %v289
        %v333 = vpack.c.bf16 %v292, %v291
        %v334 = vpack.c.bf16 %v294, %v293
        %v335 = vpack.c.bf16 %v296, %v295
        %v336 = vpack.c.bf16 %v298, %v297
        %v337 = vpack.c.bf16 %v300, %v299
        %v338 = vpack.c.bf16 %v302, %v301
        %v339 = vpack.c.bf16 %v304, %v303
        %v340 = vpack.c.bf16 %v306, %v305
        %v341 = vpack.c.bf16 %v308, %v307
        %v342 = vpack.c.bf16 %v310, %v309
        %v343 = vld [vmem:[%s1] sm:$0xf]
        %v344 = vld [vmem:[%s4] sm:$0x1]
        %v345 = vlaneseq
        %v346 = vshrl.u32 %v345, 7
        %v347 = vsub.s32 0, %v346
        %v348 = vrot.slane %v344, %v347
        %vm349 = vcmask 64512
        %v351 = vsel %vm349, %v311, 0
        %v354 = vsel %vm349, %v312, 0
        %v357 = vsel %vm349, %v313, 0
        %v360 = vsel %vm349, %v314, 0
        %v363 = vsel %vm349, %v315, 0
        %v366 = vsel %vm349, %v316, 0
        %v369 = vsel %vm349, %v317, 0
        %v372 = vsel %vm349, %v318, 0
        %v375 = vsel %vm349, %v319, 0
        %v378 = vsel %vm349, %v320, 0
        %v381 = vsel %vm349, %v321, 0
        %v384 = vsel %vm349, %v322, 0
        %v387 = vsel %vm349, %v323, 0
        %v390 = vsel %vm349, %v324, 0
        %v393 = vsel %vm349, %v325, 0
        %v396 = vsel %vm349, %v326, 0
        %v399 = vsel %vm349, %v327, 0
        %v402 = vsel %vm349, %v328, 0
        %v405 = vsel %vm349, %v329, 0
        %v408 = vsel %vm349, %v330, 0
        %v411 = vsel %vm349, %v331, 0
        %v414 = vsel %vm349, %v332, 0
        %v417 = vsel %vm349, %v333, 0
        %v420 = vsel %vm349, %v334, 0
        %v423 = vsel %vm349, %v335, 0
        %v426 = vsel %vm349, %v336, 0
        %v429 = vsel %vm349, %v337, 0
        %v432 = vsel %vm349, %v338, 0
        %v435 = vsel %vm349, %v339, 0
        %v438 = vsel %vm349, %v340, 0
        %v441 = vsel %vm349, %v341, 0
        %v444 = vsel %vm349, %v342, 0
        %vm446 = vcmask 1043456
        %v448 = vsel %vm446, %v343, 0
        %450 = vmatprep.subr.bf16.mxu0 0
        %451 = vmatpush1.bf16.msra.mxu0 %v448
        %452 = vmatprep.subr.bf16.mxu0 0
        %453 = vmatpush1.bf16.msra.mxu0 0
        %454 = vmatprep.subr.bf16.mxu0 0
        %455 = vmatpush1.bf16.msra.mxu0 0
        %456 = vmatprep.subr.bf16.mxu0 0
        %457 = vmatpush1.bf16.msra.mxu0 0
        %458 = vmatprep.subr.bf16.mxu0 0
        %459 = vmatpush1.bf16.msra.mxu0 0
        %460 = vmatprep.subr.bf16.mxu0 0
        %461 = vmatpush1.bf16.msra.mxu0 0
        %462 = vmatprep.subr.bf16.mxu0 0
        %463 = vmatpush1.bf16.msra.mxu0 0
        %464 = vmatprep.subr.bf16.mxu0 0
        %465 = vmatpush1.bf16.msra.mxu0 0
        %466 = vmatprep.subr.bf16.mxu0 0
        %467 = vmatpush1.bf16.msra.mxu0 0
        %468 = vmatprep.subr.bf16.mxu0 0
        %469 = vmatpush1.bf16.msra.mxu0 0
        %470 = vmatprep.subr.bf16.mxu0 0
        %471 = vmatpush1.bf16.msra.mxu0 0
        %472 = vmatprep.subr.bf16.mxu0 0
        %473 = vmatpush1.bf16.msra.mxu0 0
        %474 = vmatprep.subr.bf16.mxu0 0
        %475 = vmatpush1.bf16.msra.mxu0 0
        %476 = vmatprep.subr.bf16.mxu0 0
        %477 = vmatpush1.bf16.msra.mxu0 0
        %478 = vmatprep.subr.bf16.mxu0 0
        %479 = vmatpush1.bf16.msra.mxu0 0
        %480 = vmatprep.subr.bf16.mxu0 0
        %481 = vmatpush1.bf16.msra.mxu0 0
        %482 = vmatprep.mubr.bf16.mxu0 0
        %483 = vmatmul.mubr.bf16.gmra.mrb[0].mxu0 %v351
        %v484 = vpop.f32.mrb[0].mxu0
        %v485 = vadd.f32 %v348, %v484
        %v486 = vpop.f32.mrb[0].mxu0
        %v487 = vpop.f32.mrb[0].mxu0
        %v488 = vadd.f32 %v348, %v487
        %v489 = vpop.f32.mrb[0].mxu0
        %490 = vmatprep.mubr.bf16.mxu0 0
        %491 = vmatmul.mubr.bf16.gmra.mrb[0].mxu0 %v354
        %v492 = vpop.f32.mrb[0].mxu0
        %v493 = vadd.f32 %v348, %v492
        %v494 = vpop.f32.mrb[0].mxu0
        %v495 = vpop.f32.mrb[0].mxu0
        %v496 = vadd.f32 %v348, %v495
        %v497 = vpop.f32.mrb[0].mxu0
        %498 = vmatprep.mubr.bf16.mxu0 0
        %499 = vmatmul.mubr.bf16.gmra.mrb[0].mxu0 %v357
        %v500 = vpop.f32.mrb[0].mxu0
        %v501 = vadd.f32 %v348, %v500
        %v502 = vpop.f32.mrb[0].mxu0
        %v503 = vpop.f32.mrb[0].mxu0
        %v504 = vadd.f32 %v348, %v503
        %v505 = vpop.f32.mrb[0].mxu0
        %506 = vmatprep.mubr.bf16.mxu0 0
        %507 = vmatmul.mubr.bf16.gmra.mrb[0].mxu0 %v360
        %v508 = vpop.f32.mrb[0].mxu0
        %v509 = vadd.f32 %v348, %v508
        %v510 = vpop.f32.mrb[0].mxu0
        %v511 = vpop.f32.mrb[0].mxu0
        %v512 = vadd.f32 %v348, %v511
        %v513 = vpop.f32.mrb[0].mxu0
        %514 = vmatprep.mubr.bf16.mxu0 0
        %515 = vmatmul.mubr.bf16.gmra.mrb[0].mxu0 %v363
        %v516 = vpop.f32.mrb[0].mxu0
        %v517 = vadd.f32 %v348, %v516
        %v518 = vpop.f32.mrb[0].mxu0
        %v519 = vpop.f32.mrb[0].mxu0
        %v520 = vadd.f32 %v348, %v519
        %v521 = vpop.f32.mrb[0].mxu0
        %522 = vmatprep.mubr.bf16.mxu0 0
        %523 = vmatmul.mubr.bf16.gmra.mrb[0].mxu0 %v366
        %v524 = vpop.f32.mrb[0].mxu0
        %v525 = vadd.f32 %v348, %v524
        %v526 = vpop.f32.mrb[0].mxu0
        %v527 = vpop.f32.mrb[0].mxu0
        %v528 = vadd.f32 %v348, %v527
        %v529 = vpop.f32.mrb[0].mxu0
        %530 = vmatprep.mubr.bf16.mxu0 0
        %531 = vmatmul.mubr.bf16.gmra.mrb[0].mxu0 %v369
        %v532 = vpop.f32.mrb[0].mxu0
        %v533 = vadd.f32 %v348, %v532
        %v534 = vpop.f32.mrb[0].mxu0
        %v535 = vpop.f32.mrb[0].mxu0
        %v536 = vadd.f32 %v348, %v535
        %v537 = vpop.f32.mrb[0].mxu0
        %538 = vmatprep.mubr.bf16.mxu0 0
        %539 = vmatmul.mubr.bf16.gmra.mrb[0].mxu0 %v372
        %v540 = vpop.f32.mrb[0].mxu0
        %v541 = vadd.f32 %v348, %v540
        %v542 = vpop.f32.mrb[0].mxu0
        %v543 = vpop.f32.mrb[0].mxu0
        %v544 = vadd.f32 %v348, %v543
        %v545 = vpop.f32.mrb[0].mxu0
        %546 = vmatprep.mubr.bf16.mxu0 0
        %547 = vmatmul.mubr.bf16.gmra.mrb[0].mxu0 %v375
        %v548 = vpop.f32.mrb[0].mxu0
        %v549 = vadd.f32 %v348, %v548
        %v550 = vpop.f32.mrb[0].mxu0
        %v551 = vpop.f32.mrb[0].mxu0
        %v552 = vadd.f32 %v348, %v551
        %v553 = vpop.f32.mrb[0].mxu0
        %554 = vmatprep.mubr.bf16.mxu0 0
        %555 = vmatmul.mubr.bf16.gmra.mrb[0].mxu0 %v378
        %v556 = vpop.f32.mrb[0].mxu0
        %v557 = vadd.f32 %v348, %v556
        %v558 = vpop.f32.mrb[0].mxu0
        %v559 = vpop.f32.mrb[0].mxu0
        %v560 = vadd.f32 %v348, %v559
        %v561 = vpop.f32.mrb[0].mxu0
        %562 = vmatprep.mubr.bf16.mxu0 0
        %563 = vmatmul.mubr.bf16.gmra.mrb[0].mxu0 %v381
        %v564 = vpop.f32.mrb[0].mxu0
        %v565 = vadd.f32 %v348, %v564
        %v566 = vpop.f32.mrb[0].mxu0
        %v567 = vpop.f32.mrb[0].mxu0
        %v568 = vadd.f32 %v348, %v567
        %v569 = vpop.f32.mrb[0].mxu0
        %570 = vmatprep.mubr.bf16.mxu0 0
        %571 = vmatmul.mubr.bf16.gmra.mrb[0].mxu0 %v384
        %v572 = vpop.f32.mrb[0].mxu0
        %v573 = vadd.f32 %v348, %v572
        %v574 = vpop.f32.mrb[0].mxu0
        %v575 = vpop.f32.mrb[0].mxu0
        %v576 = vadd.f32 %v348, %v575
        %v577 = vpop.f32.mrb[0].mxu0
        %578 = vmatprep.mubr.bf16.mxu0 0
        %579 = vmatmul.mubr.bf16.gmra.mrb[0].mxu0 %v387
        %v580 = vpop.f32.mrb[0].mxu0
        %v581 = vadd.f32 %v348, %v580
        %v582 = vpop.f32.mrb[0].mxu0
        %v583 = vpop.f32.mrb[0].mxu0
        %v584 = vadd.f32 %v348, %v583
        %v585 = vpop.f32.mrb[0].mxu0
        %586 = vmatprep.mubr.bf16.mxu0 0
        %587 = vmatmul.mubr.bf16.gmra.mrb[0].mxu0 %v390
        %v588 = vpop.f32.mrb[0].mxu0
        %v589 = vadd.f32 %v348, %v588
        %v590 = vpop.f32.mrb[0].mxu0
        %v591 = vpop.f32.mrb[0].mxu0
        %v592 = vadd.f32 %v348, %v591
        %v593 = vpop.f32.mrb[0].mxu0
        %594 = vmatprep.mubr.bf16.mxu0 0
        %595 = vmatmul.mubr.bf16.gmra.mrb[0].mxu0 %v393
        %v596 = vpop.f32.mrb[0].mxu0
        %v597 = vadd.f32 %v348, %v596
        %v598 = vpop.f32.mrb[0].mxu0
        %v599 = vpop.f32.mrb[0].mxu0
        %v600 = vadd.f32 %v348, %v599
        %v601 = vpop.f32.mrb[0].mxu0
        %602 = vmatprep.mubr.bf16.mxu0 0
        %603 = vmatmul.mubr.bf16.gmra.mrb[0].mxu0 %v396
        %v604 = vpop.f32.mrb[0].mxu0
        %v605 = vadd.f32 %v348, %v604
        %v606 = vpop.f32.mrb[0].mxu0
        %v607 = vpop.f32.mrb[0].mxu0
        %v608 = vadd.f32 %v348, %v607
        %v609 = vpop.f32.mrb[0].mxu0
        %610 = vmatprep.mubr.bf16.mxu0 0
        %611 = vmatmul.mubr.bf16.gmra.mrb[0].mxu0 %v399
        %v612 = vpop.f32.mrb[0].mxu0
        %v613 = vadd.f32 %v348, %v612
        %v614 = vpop.f32.mrb[0].mxu0
        %v615 = vpop.f32.mrb[0].mxu0
        %v616 = vadd.f32 %v348, %v615
        %v617 = vpop.f32.mrb[0].mxu0
        %618 = vmatprep.mubr.bf16.mxu0 0
        %619 = vmatmul.mubr.bf16.gmra.mrb[0].mxu0 %v402
        %v620 = vpop.f32.mrb[0].mxu0
        %v621 = vadd.f32 %v348, %v620
        %v622 = vpop.f32.mrb[0].mxu0
        %v623 = vpop.f32.mrb[0].mxu0
        %v624 = vadd.f32 %v348, %v623
        %v625 = vpop.f32.mrb[0].mxu0
        %626 = vmatprep.mubr.bf16.mxu0 0
        %627 = vmatmul.mubr.bf16.gmra.mrb[0].mxu0 %v405
        %v628 = vpop.f32.mrb[0].mxu0
        %v629 = vadd.f32 %v348, %v628
        %v630 = vpop.f32.mrb[0].mxu0
        %v631 = vpop.f32.mrb[0].mxu0
        %v632 = vadd.f32 %v348, %v631
        %v633 = vpop.f32.mrb[0].mxu0
        %634 = vmatprep.mubr.bf16.mxu0 0
        %635 = vmatmul.mubr.bf16.gmra.mrb[0].mxu0 %v408
        %v636 = vpop.f32.mrb[0].mxu0
        %v637 = vadd.f32 %v348, %v636
        %v638 = vpop.f32.mrb[0].mxu0
        %v639 = vpop.f32.mrb[0].mxu0
        %v640 = vadd.f32 %v348, %v639
        %v641 = vpop.f32.mrb[0].mxu0
        %642 = vmatprep.mubr.bf16.mxu0 0
        %643 = vmatmul.mubr.bf16.gmra.mrb[0].mxu0 %v411
        %v644 = vpop.f32.mrb[0].mxu0
        %v645 = vadd.f32 %v348, %v644
        %v646 = vpop.f32.mrb[0].mxu0
        %v647 = vpop.f32.mrb[0].mxu0
        %v648 = vadd.f32 %v348, %v647
        %v649 = vpop.f32.mrb[0].mxu0
        %650 = vmatprep.mubr.bf16.mxu0 0
        %651 = vmatmul.mubr.bf16.gmra.mrb[0].mxu0 %v414
        %v652 = vpop.f32.mrb[0].mxu0
        %v653 = vadd.f32 %v348, %v652
        %v654 = vpop.f32.mrb[0].mxu0
        %v655 = vpop.f32.mrb[0].mxu0
        %v656 = vadd.f32 %v348, %v655
        %v657 = vpop.f32.mrb[0].mxu0
        %658 = vmatprep.mubr.bf16.mxu0 0
        %659 = vmatmul.mubr.bf16.gmra.mrb[0].mxu0 %v417
        %v660 = vpop.f32.mrb[0].mxu0
        %v661 = vadd.f32 %v348, %v660
        %v662 = vpop.f32.mrb[0].mxu0
        %v663 = vpop.f32.mrb[0].mxu0
        %v664 = vadd.f32 %v348, %v663
        %v665 = vpop.f32.mrb[0].mxu0
        %666 = vmatprep.mubr.bf16.mxu0 0
        %667 = vmatmul.mubr.bf16.gmra.mrb[0].mxu0 %v420
        %v668 = vpop.f32.mrb[0].mxu0
        %v669 = vadd.f32 %v348, %v668
        %v670 = vpop.f32.mrb[0].mxu0
        %v671 = vpop.f32.mrb[0].mxu0
        %v672 = vadd.f32 %v348, %v671
        %v673 = vpop.f32.mrb[0].mxu0
        %674 = vmatprep.mubr.bf16.mxu0 0
        %675 = vmatmul.mubr.bf16.gmra.mrb[0].mxu0 %v423
        %v676 = vpop.f32.mrb[0].mxu0
        %v677 = vadd.f32 %v348, %v676
        %v678 = vpop.f32.mrb[0].mxu0
        %v679 = vpop.f32.mrb[0].mxu0
        %v680 = vadd.f32 %v348, %v679
        %v681 = vpop.f32.mrb[0].mxu0
        %682 = vmatprep.mubr.bf16.mxu0 0
        %683 = vmatmul.mubr.bf16.gmra.mrb[0].mxu0 %v426
        %v684 = vpop.f32.mrb[0].mxu0
        %v685 = vadd.f32 %v348, %v684
        %v686 = vpop.f32.mrb[0].mxu0
        %v687 = vpop.f32.mrb[0].mxu0
        %v688 = vadd.f32 %v348, %v687
        %v689 = vpop.f32.mrb[0].mxu0
        %690 = vmatprep.mubr.bf16.mxu0 0
        %691 = vmatmul.mubr.bf16.gmra.mrb[0].mxu0 %v429
        %v692 = vpop.f32.mrb[0].mxu0
        %v693 = vadd.f32 %v348, %v692
        %v694 = vpop.f32.mrb[0].mxu0
        %v695 = vpop.f32.mrb[0].mxu0
        %v696 = vadd.f32 %v348, %v695
        %v697 = vpop.f32.mrb[0].mxu0
        %698 = vmatprep.mubr.bf16.mxu0 0
        %699 = vmatmul.mubr.bf16.gmra.mrb[0].mxu0 %v432
        %v700 = vpop.f32.mrb[0].mxu0
        %v701 = vadd.f32 %v348, %v700
        %v702 = vpop.f32.mrb[0].mxu0
        %v703 = vpop.f32.mrb[0].mxu0
        %v704 = vadd.f32 %v348, %v703
        %v705 = vpop.f32.mrb[0].mxu0
        %706 = vmatprep.mubr.bf16.mxu0 0
        %707 = vmatmul.mubr.bf16.gmra.mrb[0].mxu0 %v435
        %v708 = vpop.f32.mrb[0].mxu0
        %v709 = vadd.f32 %v348, %v708
        %v710 = vpop.f32.mrb[0].mxu0
        %v711 = vpop.f32.mrb[0].mxu0
        %v712 = vadd.f32 %v348, %v711
        %v713 = vpop.f32.mrb[0].mxu0
        %714 = vmatprep.mubr.bf16.mxu0 0
        %715 = vmatmul.mubr.bf16.gmra.mrb[0].mxu0 %v438
        %v716 = vpop.f32.mrb[0].mxu0
        %v717 = vadd.f32 %v348, %v716
        %v718 = vpop.f32.mrb[0].mxu0
        %v719 = vpop.f32.mrb[0].mxu0
        %v720 = vadd.f32 %v348, %v719
        %v721 = vpop.f32.mrb[0].mxu0
        %722 = vmatprep.mubr.bf16.mxu0 0
        %723 = vmatmul.mubr.bf16.gmra.mrb[0].mxu0 %v441
        %v724 = vpop.f32.mrb[0].mxu0
        %v725 = vadd.f32 %v348, %v724
        %v726 = vpop.f32.mrb[0].mxu0
        %v727 = vpop.f32.mrb[0].mxu0
        %v728 = vadd.f32 %v348, %v727
        %v729 = vpop.f32.mrb[0].mxu0
        %730 = vmatprep.mubr.bf16.mxu0 0
        %731 = vmatmul.mubr.bf16.gmra.mrb[0].mxu0 %v444
        %v732 = vpop.f32.mrb[0].mxu0
        %v733 = vadd.f32 %v348, %v732
        %v734 = vpop.f32.mrb[0].mxu0
        %v735 = vpop.f32.mrb[0].mxu0
        %v736 = vadd.f32 %v348, %v735
        %v737 = vpop.f32.mrb[0].mxu0
        %738 = vdwg.mxu0
        %v739 = vmax.f32 %v485, 0.0
        %v740 = vmax.f32 %v488, 0.0
        %v741 = vmax.f32 %v493, 0.0
        %v742 = vmax.f32 %v496, 0.0
        %v743 = vmax.f32 %v501, 0.0
        %v744 = vmax.f32 %v504, 0.0
        %v745 = vmax.f32 %v509, 0.0
        %v746 = vmax.f32 %v512, 0.0
        %v747 = vmax.f32 %v517, 0.0
        %v748 = vmax.f32 %v520, 0.0
        %v749 = vmax.f32 %v525, 0.0
        %v750 = vmax.f32 %v528, 0.0
        %v751 = vmax.f32 %v533, 0.0
        %v752 = vmax.f32 %v536, 0.0
        %v753 = vmax.f32 %v541, 0.0
        %v754 = vmax.f32 %v544, 0.0
        %v755 = vmax.f32 %v549, 0.0
        %v756 = vmax.f32 %v552, 0.0
        %v757 = vmax.f32 %v557, 0.0
        %v758 = vmax.f32 %v560, 0.0
        %v759 = vmax.f32 %v565, 0.0
        %v760 = vmax.f32 %v568, 0.0
        %v761 = vmax.f32 %v573, 0.0
        %v762 = vmax.f32 %v576, 0.0
        %v763 = vmax.f32 %v581, 0.0
        %v764 = vmax.f32 %v584, 0.0
        %v765 = vmax.f32 %v589, 0.0
        %v766 = vmax.f32 %v592, 0.0
        %v767 = vmax.f32 %v597, 0.0
        %v768 = vmax.f32 %v600, 0.0
        %v769 = vmax.f32 %v605, 0.0
        %v770 = vmax.f32 %v608, 0.0
        %v771 = vmax.f32 %v613, 0.0
        %v772 = vmax.f32 %v616, 0.0
        %v773 = vmax.f32 %v621, 0.0
        %v774 = vmax.f32 %v624, 0.0
        %v775 = vmax.f32 %v629, 0.0
        %v776 = vmax.f32 %v632, 0.0
        %v777 = vmax.f32 %v637, 0.0
        %v778 = vmax.f32 %v640, 0.0
        %v779 = vmax.f32 %v645, 0.0
        %v780 = vmax.f32 %v648, 0.0
        %v781 = vmax.f32 %v653, 0.0
        %v782 = vmax.f32 %v656, 0.0
        %v783 = vmax.f32 %v661, 0.0
        %v784 = vmax.f32 %v664, 0.0
        %v785 = vmax.f32 %v669, 0.0
        %v786 = vmax.f32 %v672, 0.0
        %v787 = vmax.f32 %v677, 0.0
        %v788 = vmax.f32 %v680, 0.0
        %v789 = vmax.f32 %v685, 0.0
        %v790 = vmax.f32 %v688, 0.0
        %v791 = vmax.f32 %v693, 0.0
        %v792 = vmax.f32 %v696, 0.0
        %v793 = vmax.f32 %v701, 0.0
        %v794 = vmax.f32 %v704, 0.0
        %v795 = vmax.f32 %v709, 0.0
        %v796 = vmax.f32 %v712, 0.0
        %v797 = vmax.f32 %v717, 0.0
        %v798 = vmax.f32 %v720, 0.0
        %v799 = vmax.f32 %v725, 0.0
        %v800 = vmax.f32 %v728, 0.0
        %v801 = vmax.f32 %v733, 0.0
        %v802 = vmax.f32 %v736, 0.0
        %v803 = vpack.c.bf16 %v740, %v739
        %v804 = vpack.c.bf16 %v742, %v741
        %v805 = vpack.c.bf16 %v744, %v743
        %v806 = vpack.c.bf16 %v746, %v745
        %v807 = vpack.c.bf16 %v748, %v747
        %v808 = vpack.c.bf16 %v750, %v749
        %v809 = vpack.c.bf16 %v752, %v751
        %v810 = vpack.c.bf16 %v754, %v753
        %v811 = vpack.c.bf16 %v756, %v755
        %v812 = vpack.c.bf16 %v758, %v757
        %v813 = vpack.c.bf16 %v760, %v759
        %v814 = vpack.c.bf16 %v762, %v761
        %v815 = vpack.c.bf16 %v764, %v763
        %v816 = vpack.c.bf16 %v766, %v765
        %v817 = vpack.c.bf16 %v768, %v767
        %v818 = vpack.c.bf16 %v770, %v769
        %v819 = vpack.c.bf16 %v772, %v771
        %v820 = vpack.c.bf16 %v774, %v773
        %v821 = vpack.c.bf16 %v776, %v775
        %v822 = vpack.c.bf16 %v778, %v777
        %v823 = vpack.c.bf16 %v780, %v779
        %v824 = vpack.c.bf16 %v782, %v781
        %v825 = vpack.c.bf16 %v784, %v783
        %v826 = vpack.c.bf16 %v786, %v785
        %v827 = vpack.c.bf16 %v788, %v787
        %v828 = vpack.c.bf16 %v790, %v789
        %v829 = vpack.c.bf16 %v792, %v791
        %v830 = vpack.c.bf16 %v794, %v793
        %v831 = vpack.c.bf16 %v796, %v795
        %v832 = vpack.c.bf16 %v798, %v797
        %v833 = vpack.c.bf16 %v800, %v799
        %v834 = vpack.c.bf16 %v802, %v801
        %v835 = vld [vmem:[%s2] sm:$0xf]
        %v836 = vld [vmem:[%s2 + $0x4] sm:$0xf]
        %v837 = vld [vmem:[%s2 + $0x8] sm:$0xf]
        %v838 = vld [vmem:[%s2 + $0xc] sm:$0xf]
        %v839 = vld [vmem:[%s4 + $0x1] sm:$0x1]
        %v840 = vlaneseq
        %v841 = vshrl.u32 %v840, 7
        %v842 = vsub.s32 0, %v841
        %v843 = vrot.slane %v839, %v842
        %v848 = vunpack.c.l.b16 %v835
        %v849 = vunpack.c.l.b16 %v836
        %v850 = vunpack.c.l.b16 %v837
        %v851 = vunpack.c.l.b16 %v838
        %v852 = vpack.c.b16 %v849, %v848
        %v853 = vpack.c.b16 %v851, %v850
        %vm856 = vcmask 261120
        %v858 = vsel %vm856, %v803, 0
        %v861 = vsel %vm856, %v804, 0
        %v864 = vsel %vm856, %v805, 0
        %v867 = vsel %vm856, %v806, 0
        %v870 = vsel %vm856, %v807, 0
        %v873 = vsel %vm856, %v808, 0
        %v876 = vsel %vm856, %v809, 0
        %v879 = vsel %vm856, %v810, 0
        %v882 = vsel %vm856, %v811, 0
        %v885 = vsel %vm856, %v812, 0
        %v888 = vsel %vm856, %v813, 0
        %v891 = vsel %vm856, %v814, 0
        %v894 = vsel %vm856, %v815, 0
        %v897 = vsel %vm856, %v816, 0
        %v900 = vsel %vm856, %v817, 0
        %v903 = vsel %vm856, %v818, 0
        %v906 = vsel %vm856, %v819, 0
        %v909 = vsel %vm856, %v820, 0
        %v912 = vsel %vm856, %v821, 0
        %v915 = vsel %vm856, %v822, 0
        %v918 = vsel %vm856, %v823, 0
        %v921 = vsel %vm856, %v824, 0
        %v924 = vsel %vm856, %v825, 0
        %v927 = vsel %vm856, %v826, 0
        %v930 = vsel %vm856, %v827, 0
        %v933 = vsel %vm856, %v828, 0
        %v936 = vsel %vm856, %v829, 0
        %v939 = vsel %vm856, %v830, 0
        %v942 = vsel %vm856, %v831, 0
        %v945 = vsel %vm856, %v832, 0
        %v948 = vsel %vm856, %v833, 0
        %v951 = vsel %vm856, %v834, 0
        %953 = vmatprep.subr.bf16.mxu0 0
        %954 = vmatpush1.bf16.msra.mxu0 %v852
        %955 = vmatprep.subr.bf16.mxu0 0
        %956 = vmatpush1.bf16.msra.mxu0 %v853
        %957 = vmatprep.subr.bf16.mxu0 0
        %958 = vmatpush1.bf16.msra.mxu0 0
        %959 = vmatprep.subr.bf16.mxu0 0
        %960 = vmatpush1.bf16.msra.mxu0 0
        %961 = vmatprep.subr.bf16.mxu0 0
        %962 = vmatpush1.bf16.msra.mxu0 0
        %963 = vmatprep.subr.bf16.mxu0 0
        %964 = vmatpush1.bf16.msra.mxu0 0
        %965 = vmatprep.subr.bf16.mxu0 0
        %966 = vmatpush1.bf16.msra.mxu0 0
        %967 = vmatprep.subr.bf16.mxu0 0
        %968 = vmatpush1.bf16.msra.mxu0 0
        %969 = vmatprep.subr.bf16.mxu0 0
        %970 = vmatpush1.bf16.msra.mxu0 0
        %971 = vmatprep.subr.bf16.mxu0 0
        %972 = vmatpush1.bf16.msra.mxu0 0
        %973 = vmatprep.subr.bf16.mxu0 0
        %974 = vmatpush1.bf16.msra.mxu0 0
        %975 = vmatprep.subr.bf16.mxu0 0
        %976 = vmatpush1.bf16.msra.mxu0 0
        %977 = vmatprep.subr.bf16.mxu0 0
        %978 = vmatpush1.bf16.msra.mxu0 0
        %979 = vmatprep.subr.bf16.mxu0 0
        %980 = vmatpush1.bf16.msra.mxu0 0
        %981 = vmatprep.subr.bf16.mxu0 0
        %982 = vmatpush1.bf16.msra.mxu0 0
        %983 = vmatprep.subr.bf16.mxu0 0
        %984 = vmatpush1.bf16.msra.mxu0 0
        %985 = vmatprep.mubr.bf16.mxu0 0
        %986 = vmatmul.mubr.bf16.gmra.mrb[0].mxu0 %v858
        %v987 = vpop.f32.mrb[0].mxu0
        %v988 = vadd.f32 %v843, %v987
        %v989 = vpop.f32.mrb[0].mxu0
        %v990 = vpop.f32.mrb[0].mxu0
        %v991 = vadd.f32 %v843, %v990
        %v992 = vpop.f32.mrb[0].mxu0
        %993 = vmatprep.mubr.bf16.mxu0 0
        %994 = vmatmul.mubr.bf16.gmra.mrb[0].mxu0 %v861
        %v995 = vpop.f32.mrb[0].mxu0
        %v996 = vadd.f32 %v843, %v995
        %v997 = vpop.f32.mrb[0].mxu0
        %v998 = vpop.f32.mrb[0].mxu0
        %v999 = vadd.f32 %v843, %v998
        %v1000 = vpop.f32.mrb[0].mxu0
        %1001 = vmatprep.mubr.bf16.mxu0 0
        %1002 = vmatmul.mubr.bf16.gmra.mrb[0].mxu0 %v864
        %v1003 = vpop.f32.mrb[0].mxu0
        %v1004 = vadd.f32 %v843, %v1003
        %v1005 = vpop.f32.mrb[0].mxu0
        %v1006 = vpop.f32.mrb[0].mxu0
        %v1007 = vadd.f32 %v843, %v1006
        %v1008 = vpop.f32.mrb[0].mxu0
        %1009 = vmatprep.mubr.bf16.mxu0 0
        %1010 = vmatmul.mubr.bf16.gmra.mrb[0].mxu0 %v867
        %v1011 = vpop.f32.mrb[0].mxu0
        %v1012 = vadd.f32 %v843, %v1011
        %v1013 = vpop.f32.mrb[0].mxu0
        %v1014 = vpop.f32.mrb[0].mxu0
        %v1015 = vadd.f32 %v843, %v1014
        %v1016 = vpop.f32.mrb[0].mxu0
        %1017 = vmatprep.mubr.bf16.mxu0 0
        %1018 = vmatmul.mubr.bf16.gmra.mrb[0].mxu0 %v870
        %v1019 = vpop.f32.mrb[0].mxu0
        %v1020 = vadd.f32 %v843, %v1019
        %v1021 = vpop.f32.mrb[0].mxu0
        %v1022 = vpop.f32.mrb[0].mxu0
        %v1023 = vadd.f32 %v843, %v1022
        %v1024 = vpop.f32.mrb[0].mxu0
        %1025 = vmatprep.mubr.bf16.mxu0 0
        %1026 = vmatmul.mubr.bf16.gmra.mrb[0].mxu0 %v873
        %v1027 = vpop.f32.mrb[0].mxu0
        %v1028 = vadd.f32 %v843, %v1027
        %v1029 = vpop.f32.mrb[0].mxu0
        %v1030 = vpop.f32.mrb[0].mxu0
        %v1031 = vadd.f32 %v843, %v1030
        %v1032 = vpop.f32.mrb[0].mxu0
        %1033 = vmatprep.mubr.bf16.mxu0 0
        %1034 = vmatmul.mubr.bf16.gmra.mrb[0].mxu0 %v876
        %v1035 = vpop.f32.mrb[0].mxu0
        %v1036 = vadd.f32 %v843, %v1035
        %v1037 = vpop.f32.mrb[0].mxu0
        %v1038 = vpop.f32.mrb[0].mxu0
        %v1039 = vadd.f32 %v843, %v1038
        %v1040 = vpop.f32.mrb[0].mxu0
        %1041 = vmatprep.mubr.bf16.mxu0 0
        %1042 = vmatmul.mubr.bf16.gmra.mrb[0].mxu0 %v879
        %v1043 = vpop.f32.mrb[0].mxu0
        %v1044 = vadd.f32 %v843, %v1043
        %v1045 = vpop.f32.mrb[0].mxu0
        %v1046 = vpop.f32.mrb[0].mxu0
        %v1047 = vadd.f32 %v843, %v1046
        %v1048 = vpop.f32.mrb[0].mxu0
        %1049 = vmatprep.mubr.bf16.mxu0 0
        %1050 = vmatmul.mubr.bf16.gmra.mrb[0].mxu0 %v882
        %v1051 = vpop.f32.mrb[0].mxu0
        %v1052 = vadd.f32 %v843, %v1051
        %v1053 = vpop.f32.mrb[0].mxu0
        %v1054 = vpop.f32.mrb[0].mxu0
        %v1055 = vadd.f32 %v843, %v1054
        %v1056 = vpop.f32.mrb[0].mxu0
        %1057 = vmatprep.mubr.bf16.mxu0 0
        %1058 = vmatmul.mubr.bf16.gmra.mrb[0].mxu0 %v885
        %v1059 = vpop.f32.mrb[0].mxu0
        %v1060 = vadd.f32 %v843, %v1059
        %v1061 = vpop.f32.mrb[0].mxu0
        %v1062 = vpop.f32.mrb[0].mxu0
        %v1063 = vadd.f32 %v843, %v1062
        %v1064 = vpop.f32.mrb[0].mxu0
        %1065 = vmatprep.mubr.bf16.mxu0 0
        %1066 = vmatmul.mubr.bf16.gmra.mrb[0].mxu0 %v888
        %v1067 = vpop.f32.mrb[0].mxu0
        %v1068 = vadd.f32 %v843, %v1067
        %v1069 = vpop.f32.mrb[0].mxu0
        %v1070 = vpop.f32.mrb[0].mxu0
        %v1071 = vadd.f32 %v843, %v1070
        %v1072 = vpop.f32.mrb[0].mxu0
        %1073 = vmatprep.mubr.bf16.mxu0 0
        %1074 = vmatmul.mubr.bf16.gmra.mrb[0].mxu0 %v891
        %v1075 = vpop.f32.mrb[0].mxu0
        %v1076 = vadd.f32 %v843, %v1075
        %v1077 = vpop.f32.mrb[0].mxu0
        %v1078 = vpop.f32.mrb[0].mxu0
        %v1079 = vadd.f32 %v843, %v1078
        %v1080 = vpop.f32.mrb[0].mxu0
        %1081 = vmatprep.mubr.bf16.mxu0 0
        %1082 = vmatmul.mubr.bf16.gmra.mrb[0].mxu0 %v894
        %v1083 = vpop.f32.mrb[0].mxu0
        %v1084 = vadd.f32 %v843, %v1083
        %v1085 = vpop.f32.mrb[0].mxu0
        %v1086 = vpop.f32.mrb[0].mxu0
        %v1087 = vadd.f32 %v843, %v1086
        %v1088 = vpop.f32.mrb[0].mxu0
        %1089 = vmatprep.mubr.bf16.mxu0 0
        %1090 = vmatmul.mubr.bf16.gmra.mrb[0].mxu0 %v897
        %v1091 = vpop.f32.mrb[0].mxu0
        %v1092 = vadd.f32 %v843, %v1091
        %v1093 = vpop.f32.mrb[0].mxu0
        %v1094 = vpop.f32.mrb[0].mxu0
        %v1095 = vadd.f32 %v843, %v1094
        %v1096 = vpop.f32.mrb[0].mxu0
        %1097 = vmatprep.mubr.bf16.mxu0 0
        %1098 = vmatmul.mubr.bf16.gmra.mrb[0].mxu0 %v900
        %v1099 = vpop.f32.mrb[0].mxu0
        %v1100 = vadd.f32 %v843, %v1099
        %v1101 = vpop.f32.mrb[0].mxu0
        %v1102 = vpop.f32.mrb[0].mxu0
        %v1103 = vadd.f32 %v843, %v1102
        %v1104 = vpop.f32.mrb[0].mxu0
        %1105 = vmatprep.mubr.bf16.mxu0 0
        %1106 = vmatmul.mubr.bf16.gmra.mrb[0].mxu0 %v903
        %v1107 = vpop.f32.mrb[0].mxu0
        %v1108 = vadd.f32 %v843, %v1107
        %v1109 = vpop.f32.mrb[0].mxu0
        %v1110 = vpop.f32.mrb[0].mxu0
        %v1111 = vadd.f32 %v843, %v1110
        %v1112 = vpop.f32.mrb[0].mxu0
        %1113 = vmatprep.mubr.bf16.mxu0 0
        %1114 = vmatmul.mubr.bf16.gmra.mrb[0].mxu0 %v906
        %v1115 = vpop.f32.mrb[0].mxu0
        %v1116 = vadd.f32 %v843, %v1115
        %v1117 = vpop.f32.mrb[0].mxu0
        %v1118 = vpop.f32.mrb[0].mxu0
        %v1119 = vadd.f32 %v843, %v1118
        %v1120 = vpop.f32.mrb[0].mxu0
        %1121 = vmatprep.mubr.bf16.mxu0 0
        %1122 = vmatmul.mubr.bf16.gmra.mrb[0].mxu0 %v909
        %v1123 = vpop.f32.mrb[0].mxu0
        %v1124 = vadd.f32 %v843, %v1123
        %v1125 = vpop.f32.mrb[0].mxu0
        %v1126 = vpop.f32.mrb[0].mxu0
        %v1127 = vadd.f32 %v843, %v1126
        %v1128 = vpop.f32.mrb[0].mxu0
        %1129 = vmatprep.mubr.bf16.mxu0 0
        %1130 = vmatmul.mubr.bf16.gmra.mrb[0].mxu0 %v912
        %v1131 = vpop.f32.mrb[0].mxu0
        %v1132 = vadd.f32 %v843, %v1131
        %v1133 = vpop.f32.mrb[0].mxu0
        %v1134 = vpop.f32.mrb[0].mxu0
        %v1135 = vadd.f32 %v843, %v1134
        %v1136 = vpop.f32.mrb[0].mxu0
        %1137 = vmatprep.mubr.bf16.mxu0 0
        %1138 = vmatmul.mubr.bf16.gmra.mrb[0].mxu0 %v915
        %v1139 = vpop.f32.mrb[0].mxu0
        %v1140 = vadd.f32 %v843, %v1139
        %v1141 = vpop.f32.mrb[0].mxu0
        %v1142 = vpop.f32.mrb[0].mxu0
        %v1143 = vadd.f32 %v843, %v1142
        %v1144 = vpop.f32.mrb[0].mxu0
        %1145 = vmatprep.mubr.bf16.mxu0 0
        %1146 = vmatmul.mubr.bf16.gmra.mrb[0].mxu0 %v918
        %v1147 = vpop.f32.mrb[0].mxu0
        %v1148 = vadd.f32 %v843, %v1147
        %v1149 = vpop.f32.mrb[0].mxu0
        %v1150 = vpop.f32.mrb[0].mxu0
        %v1151 = vadd.f32 %v843, %v1150
        %v1152 = vpop.f32.mrb[0].mxu0
        %1153 = vmatprep.mubr.bf16.mxu0 0
        %1154 = vmatmul.mubr.bf16.gmra.mrb[0].mxu0 %v921
        %v1155 = vpop.f32.mrb[0].mxu0
        %v1156 = vadd.f32 %v843, %v1155
        %v1157 = vpop.f32.mrb[0].mxu0
        %v1158 = vpop.f32.mrb[0].mxu0
        %v1159 = vadd.f32 %v843, %v1158
        %v1160 = vpop.f32.mrb[0].mxu0
        %1161 = vmatprep.mubr.bf16.mxu0 0
        %1162 = vmatmul.mubr.bf16.gmra.mrb[0].mxu0 %v924
        %v1163 = vpop.f32.mrb[0].mxu0
        %v1164 = vadd.f32 %v843, %v1163
        %v1165 = vpop.f32.mrb[0].mxu0
        %v1166 = vpop.f32.mrb[0].mxu0
        %v1167 = vadd.f32 %v843, %v1166
        %v1168 = vpop.f32.mrb[0].mxu0
        %1169 = vmatprep.mubr.bf16.mxu0 0
        %1170 = vmatmul.mubr.bf16.gmra.mrb[0].mxu0 %v927
        %v1171 = vpop.f32.mrb[0].mxu0
        %v1172 = vadd.f32 %v843, %v1171
        %v1173 = vpop.f32.mrb[0].mxu0
        %v1174 = vpop.f32.mrb[0].mxu0
        %v1175 = vadd.f32 %v843, %v1174
        %v1176 = vpop.f32.mrb[0].mxu0
        %1177 = vmatprep.mubr.bf16.mxu0 0
        %1178 = vmatmul.mubr.bf16.gmra.mrb[0].mxu0 %v930
        %v1179 = vpop.f32.mrb[0].mxu0
        %v1180 = vadd.f32 %v843, %v1179
        %v1181 = vpop.f32.mrb[0].mxu0
        %v1182 = vpop.f32.mrb[0].mxu0
        %v1183 = vadd.f32 %v843, %v1182
        %v1184 = vpop.f32.mrb[0].mxu0
        %1185 = vmatprep.mubr.bf16.mxu0 0
        %1186 = vmatmul.mubr.bf16.gmra.mrb[0].mxu0 %v933
        %v1187 = vpop.f32.mrb[0].mxu0
        %v1188 = vadd.f32 %v843, %v1187
        %v1189 = vpop.f32.mrb[0].mxu0
        %v1190 = vpop.f32.mrb[0].mxu0
        %v1191 = vadd.f32 %v843, %v1190
        %v1192 = vpop.f32.mrb[0].mxu0
        %1193 = vmatprep.mubr.bf16.mxu0 0
        %1194 = vmatmul.mubr.bf16.gmra.mrb[0].mxu0 %v936
        %v1195 = vpop.f32.mrb[0].mxu0
        %v1196 = vadd.f32 %v843, %v1195
        %v1197 = vpop.f32.mrb[0].mxu0
        %v1198 = vpop.f32.mrb[0].mxu0
        %v1199 = vadd.f32 %v843, %v1198
        %v1200 = vpop.f32.mrb[0].mxu0
        %1201 = vmatprep.mubr.bf16.mxu0 0
        %1202 = vmatmul.mubr.bf16.gmra.mrb[0].mxu0 %v939
        %v1203 = vpop.f32.mrb[0].mxu0
        %v1204 = vadd.f32 %v843, %v1203
        %v1205 = vpop.f32.mrb[0].mxu0
        %v1206 = vpop.f32.mrb[0].mxu0
        %v1207 = vadd.f32 %v843, %v1206
        %v1208 = vpop.f32.mrb[0].mxu0
        %1209 = vmatprep.mubr.bf16.mxu0 0
        %1210 = vmatmul.mubr.bf16.gmra.mrb[0].mxu0 %v942
        %v1211 = vpop.f32.mrb[0].mxu0
        %v1212 = vadd.f32 %v843, %v1211
        %v1213 = vpop.f32.mrb[0].mxu0
        %v1214 = vpop.f32.mrb[0].mxu0
        %v1215 = vadd.f32 %v843, %v1214
        %v1216 = vpop.f32.mrb[0].mxu0
        %1217 = vmatprep.mubr.bf16.mxu0 0
        %1218 = vmatmul.mubr.bf16.gmra.mrb[0].mxu0 %v945
        %v1219 = vpop.f32.mrb[0].mxu0
        %v1220 = vadd.f32 %v843, %v1219
        %v1221 = vpop.f32.mrb[0].mxu0
        %v1222 = vpop.f32.mrb[0].mxu0
        %v1223 = vadd.f32 %v843, %v1222
        %v1224 = vpop.f32.mrb[0].mxu0
        %1225 = vmatprep.mubr.bf16.mxu0 0
        %1226 = vmatmul.mubr.bf16.gmra.mrb[0].mxu0 %v948
        %v1227 = vpop.f32.mrb[0].mxu0
        %v1228 = vadd.f32 %v843, %v1227
        %v1229 = vpop.f32.mrb[0].mxu0
        %v1230 = vpop.f32.mrb[0].mxu0
        %v1231 = vadd.f32 %v843, %v1230
        %v1232 = vpop.f32.mrb[0].mxu0
        %1233 = vmatprep.mubr.bf16.mxu0 0
        %1234 = vmatmul.mubr.bf16.gmra.mrb[0].mxu0 %v951
        %v1235 = vpop.f32.mrb[0].mxu0
        %v1236 = vadd.f32 %v843, %v1235
        %v1237 = vpop.f32.mrb[0].mxu0
        %v1238 = vpop.f32.mrb[0].mxu0
        %v1239 = vadd.f32 %v843, %v1238
        %v1240 = vpop.f32.mrb[0].mxu0
        %1241 = vdwg.mxu0
        %v1242 = vmax.f32 %v988, 0.0
        %v1243 = vmax.f32 %v991, 0.0
        %v1244 = vmax.f32 %v996, 0.0
        %v1245 = vmax.f32 %v999, 0.0
        %v1246 = vmax.f32 %v1004, 0.0
        %v1247 = vmax.f32 %v1007, 0.0
        %v1248 = vmax.f32 %v1012, 0.0
        %v1249 = vmax.f32 %v1015, 0.0
        %v1250 = vmax.f32 %v1020, 0.0
        %v1251 = vmax.f32 %v1023, 0.0
        %v1252 = vmax.f32 %v1028, 0.0
        %v1253 = vmax.f32 %v1031, 0.0
        %v1254 = vmax.f32 %v1036, 0.0
        %v1255 = vmax.f32 %v1039, 0.0
        %v1256 = vmax.f32 %v1044, 0.0
        %v1257 = vmax.f32 %v1047, 0.0
        %v1258 = vmax.f32 %v1052, 0.0
        %v1259 = vmax.f32 %v1055, 0.0
        %v1260 = vmax.f32 %v1060, 0.0
        %v1261 = vmax.f32 %v1063, 0.0
        %v1262 = vmax.f32 %v1068, 0.0
        %v1263 = vmax.f32 %v1071, 0.0
        %v1264 = vmax.f32 %v1076, 0.0
        %v1265 = vmax.f32 %v1079, 0.0
        %v1266 = vmax.f32 %v1084, 0.0
        %v1267 = vmax.f32 %v1087, 0.0
        %v1268 = vmax.f32 %v1092, 0.0
        %v1269 = vmax.f32 %v1095, 0.0
        %v1270 = vmax.f32 %v1100, 0.0
        %v1271 = vmax.f32 %v1103, 0.0
        %v1272 = vmax.f32 %v1108, 0.0
        %v1273 = vmax.f32 %v1111, 0.0
        %v1274 = vmax.f32 %v1116, 0.0
        %v1275 = vmax.f32 %v1119, 0.0
        %v1276 = vmax.f32 %v1124, 0.0
        %v1277 = vmax.f32 %v1127, 0.0
        %v1278 = vmax.f32 %v1132, 0.0
        %v1279 = vmax.f32 %v1135, 0.0
        %v1280 = vmax.f32 %v1140, 0.0
        %v1281 = vmax.f32 %v1143, 0.0
        %v1282 = vmax.f32 %v1148, 0.0
        %v1283 = vmax.f32 %v1151, 0.0
        %v1284 = vmax.f32 %v1156, 0.0
        %v1285 = vmax.f32 %v1159, 0.0
        %v1286 = vmax.f32 %v1164, 0.0
        %v1287 = vmax.f32 %v1167, 0.0
        %v1288 = vmax.f32 %v1172, 0.0
        %v1289 = vmax.f32 %v1175, 0.0
        %v1290 = vmax.f32 %v1180, 0.0
        %v1291 = vmax.f32 %v1183, 0.0
        %v1292 = vmax.f32 %v1188, 0.0
        %v1293 = vmax.f32 %v1191, 0.0
        %v1294 = vmax.f32 %v1196, 0.0
        %v1295 = vmax.f32 %v1199, 0.0
        %v1296 = vmax.f32 %v1204, 0.0
        %v1297 = vmax.f32 %v1207, 0.0
        %v1298 = vmax.f32 %v1212, 0.0
        %v1299 = vmax.f32 %v1215, 0.0
        %v1300 = vmax.f32 %v1220, 0.0
        %v1301 = vmax.f32 %v1223, 0.0
        %v1302 = vmax.f32 %v1228, 0.0
        %v1303 = vmax.f32 %v1231, 0.0
        %v1304 = vmax.f32 %v1236, 0.0
        %v1305 = vmax.f32 %v1239, 0.0
        %v1306 = vpack.c.bf16 %v1243, %v1242
        %v1307 = vpack.c.bf16 %v1245, %v1244
        %v1308 = vpack.c.bf16 %v1247, %v1246
        %v1309 = vpack.c.bf16 %v1249, %v1248
        %v1310 = vpack.c.bf16 %v1251, %v1250
        %v1311 = vpack.c.bf16 %v1253, %v1252
        %v1312 = vpack.c.bf16 %v1255, %v1254
        %v1313 = vpack.c.bf16 %v1257, %v1256
        %v1314 = vpack.c.bf16 %v1259, %v1258
        %v1315 = vpack.c.bf16 %v1261, %v1260
        %v1316 = vpack.c.bf16 %v1263, %v1262
        %v1317 = vpack.c.bf16 %v1265, %v1264
        %v1318 = vpack.c.bf16 %v1267, %v1266
        %v1319 = vpack.c.bf16 %v1269, %v1268
        %v1320 = vpack.c.bf16 %v1271, %v1270
        %v1321 = vpack.c.bf16 %v1273, %v1272
        %v1322 = vpack.c.bf16 %v1275, %v1274
        %v1323 = vpack.c.bf16 %v1277, %v1276
        %v1324 = vpack.c.bf16 %v1279, %v1278
        %v1325 = vpack.c.bf16 %v1281, %v1280
        %v1326 = vpack.c.bf16 %v1283, %v1282
        %v1327 = vpack.c.bf16 %v1285, %v1284
        %v1328 = vpack.c.bf16 %v1287, %v1286
        %v1329 = vpack.c.bf16 %v1289, %v1288
        %v1330 = vpack.c.bf16 %v1291, %v1290
        %v1331 = vpack.c.bf16 %v1293, %v1292
        %v1332 = vpack.c.bf16 %v1295, %v1294
        %v1333 = vpack.c.bf16 %v1297, %v1296
        %v1334 = vpack.c.bf16 %v1299, %v1298
        %v1335 = vpack.c.bf16 %v1301, %v1300
        %v1336 = vpack.c.bf16 %v1303, %v1302
        %v1337 = vpack.c.bf16 %v1305, %v1304
        %v1338 = vld [vmem:[%s3] sm:$0xf]
        %v1339 = vld [vmem:[%s3 + $0x4] sm:$0xf]
        %v1340 = vld [vmem:[%s3 + $0x8] sm:$0xf]
        %v1341 = vld [vmem:[%s3 + $0xc] sm:$0xf]
        %v1342 = vld [vmem:[%s4 + $0x2] sm:$0x1]
        %v1343 = vlaneseq
        %v1344 = vshrl.u32 %v1343, 7
        %v1345 = vsub.s32 0, %v1344
        %v1346 = vrot.slane %v1342, %v1345
        %v1351 = vunpack.c.l.b16 %v1338
        %v1352 = vunpack.c.l.b16 %v1339
        %v1353 = vunpack.c.l.b16 %v1340
        %v1354 = vunpack.c.l.b16 %v1341
        %v1355 = vpack.c.b16 %v1352, %v1351
        %v1356 = vpack.c.b16 %v1354, %v1353
        %v1360 = vsel %vm856, %v1306, 0
        %v1363 = vsel %vm856, %v1307, 0
        %v1366 = vsel %vm856, %v1308, 0
        %v1369 = vsel %vm856, %v1309, 0
        %v1372 = vsel %vm856, %v1310, 0
        %v1375 = vsel %vm856, %v1311, 0
        %v1378 = vsel %vm856, %v1312, 0
        %v1381 = vsel %vm856, %v1313, 0
        %v1384 = vsel %vm856, %v1314, 0
        %v1387 = vsel %vm856, %v1315, 0
        %v1390 = vsel %vm856, %v1316, 0
        %v1393 = vsel %vm856, %v1317, 0
        %v1396 = vsel %vm856, %v1318, 0
        %v1399 = vsel %vm856, %v1319, 0
        %v1402 = vsel %vm856, %v1320, 0
        %v1405 = vsel %vm856, %v1321, 0
        %v1408 = vsel %vm856, %v1322, 0
        %v1411 = vsel %vm856, %v1323, 0
        %v1414 = vsel %vm856, %v1324, 0
        %v1417 = vsel %vm856, %v1325, 0
        %v1420 = vsel %vm856, %v1326, 0
        %v1423 = vsel %vm856, %v1327, 0
        %v1426 = vsel %vm856, %v1328, 0
        %v1429 = vsel %vm856, %v1329, 0
        %v1432 = vsel %vm856, %v1330, 0
        %v1435 = vsel %vm856, %v1331, 0
        %v1438 = vsel %vm856, %v1332, 0
        %v1441 = vsel %vm856, %v1333, 0
        %v1444 = vsel %vm856, %v1334, 0
        %v1447 = vsel %vm856, %v1335, 0
        %v1450 = vsel %vm856, %v1336, 0
        %v1453 = vsel %vm856, %v1337, 0
        %1455 = vmatprep.subr.bf16.mxu0 0
        %1456 = vmatpush1.bf16.msra.mxu0 %v1355
        %1457 = vmatprep.subr.bf16.mxu0 0
        %1458 = vmatpush1.bf16.msra.mxu0 %v1356
        %1459 = vmatprep.subr.bf16.mxu0 0
        %1460 = vmatpush1.bf16.msra.mxu0 0
        %1461 = vmatprep.subr.bf16.mxu0 0
        %1462 = vmatpush1.bf16.msra.mxu0 0
        %1463 = vmatprep.subr.bf16.mxu0 0
        %1464 = vmatpush1.bf16.msra.mxu0 0
        %1465 = vmatprep.subr.bf16.mxu0 0
        %1466 = vmatpush1.bf16.msra.mxu0 0
        %1467 = vmatprep.subr.bf16.mxu0 0
        %1468 = vmatpush1.bf16.msra.mxu0 0
        %1469 = vmatprep.subr.bf16.mxu0 0
        %1470 = vmatpush1.bf16.msra.mxu0 0
        %1471 = vmatprep.subr.bf16.mxu0 0
        %1472 = vmatpush1.bf16.msra.mxu0 0
        %1473 = vmatprep.subr.bf16.mxu0 0
        %1474 = vmatpush1.bf16.msra.mxu0 0
        %1475 = vmatprep.subr.bf16.mxu0 0
        %1476 = vmatpush1.bf16.msra.mxu0 0
        %1477 = vmatprep.subr.bf16.mxu0 0
        %1478 = vmatpush1.bf16.msra.mxu0 0
        %1479 = vmatprep.subr.bf16.mxu0 0
        %1480 = vmatpush1.bf16.msra.mxu0 0
        %1481 = vmatprep.subr.bf16.mxu0 0
        %1482 = vmatpush1.bf16.msra.mxu0 0
        %1483 = vmatprep.subr.bf16.mxu0 0
        %1484 = vmatpush1.bf16.msra.mxu0 0
        %1485 = vmatprep.subr.bf16.mxu0 0
        %1486 = vmatpush1.bf16.msra.mxu0 0
        %1487 = vmatprep.mubr.bf16.mxu0 0
        %1488 = vmatmul.mubr.bf16.gmra.mrb[0].mxu0 %v1360
        %v1489 = vpop.f32.mrb[0].mxu0
        %v1490 = vadd.f32 %v1346, %v1489
        %v1491 = vpop.f32.mrb[0].mxu0
        %v1492 = vpop.f32.mrb[0].mxu0
        %v1493 = vadd.f32 %v1346, %v1492
        %v1494 = vpop.f32.mrb[0].mxu0
        %1495 = vmatprep.mubr.bf16.mxu0 0
        %1496 = vmatmul.mubr.bf16.gmra.mrb[0].mxu0 %v1363
        %v1497 = vpop.f32.mrb[0].mxu0
        %v1498 = vadd.f32 %v1346, %v1497
        %v1499 = vpop.f32.mrb[0].mxu0
        %v1500 = vpop.f32.mrb[0].mxu0
        %v1501 = vadd.f32 %v1346, %v1500
        %v1502 = vpop.f32.mrb[0].mxu0
        %1503 = vmatprep.mubr.bf16.mxu0 0
        %1504 = vmatmul.mubr.bf16.gmra.mrb[0].mxu0 %v1366
        %v1505 = vpop.f32.mrb[0].mxu0
        %v1506 = vadd.f32 %v1346, %v1505
        %v1507 = vpop.f32.mrb[0].mxu0
        %v1508 = vpop.f32.mrb[0].mxu0
        %v1509 = vadd.f32 %v1346, %v1508
        %v1510 = vpop.f32.mrb[0].mxu0
        %1511 = vmatprep.mubr.bf16.mxu0 0
        %1512 = vmatmul.mubr.bf16.gmra.mrb[0].mxu0 %v1369
        %v1513 = vpop.f32.mrb[0].mxu0
        %v1514 = vadd.f32 %v1346, %v1513
        %v1515 = vpop.f32.mrb[0].mxu0
        %v1516 = vpop.f32.mrb[0].mxu0
        %v1517 = vadd.f32 %v1346, %v1516
        %v1518 = vpop.f32.mrb[0].mxu0
        %1519 = vmatprep.mubr.bf16.mxu0 0
        %1520 = vmatmul.mubr.bf16.gmra.mrb[0].mxu0 %v1372
        %v1521 = vpop.f32.mrb[0].mxu0
        %v1522 = vadd.f32 %v1346, %v1521
        %v1523 = vpop.f32.mrb[0].mxu0
        %v1524 = vpop.f32.mrb[0].mxu0
        %v1525 = vadd.f32 %v1346, %v1524
        %v1526 = vpop.f32.mrb[0].mxu0
        %1527 = vmatprep.mubr.bf16.mxu0 0
        %1528 = vmatmul.mubr.bf16.gmra.mrb[0].mxu0 %v1375
        %v1529 = vpop.f32.mrb[0].mxu0
        %v1530 = vadd.f32 %v1346, %v1529
        %v1531 = vpop.f32.mrb[0].mxu0
        %v1532 = vpop.f32.mrb[0].mxu0
        %v1533 = vadd.f32 %v1346, %v1532
        %v1534 = vpop.f32.mrb[0].mxu0
        %1535 = vmatprep.mubr.bf16.mxu0 0
        %1536 = vmatmul.mubr.bf16.gmra.mrb[0].mxu0 %v1378
        %v1537 = vpop.f32.mrb[0].mxu0
        %v1538 = vadd.f32 %v1346, %v1537
        %v1539 = vpop.f32.mrb[0].mxu0
        %v1540 = vpop.f32.mrb[0].mxu0
        %v1541 = vadd.f32 %v1346, %v1540
        %v1542 = vpop.f32.mrb[0].mxu0
        %1543 = vmatprep.mubr.bf16.mxu0 0
        %1544 = vmatmul.mubr.bf16.gmra.mrb[0].mxu0 %v1381
        %v1545 = vpop.f32.mrb[0].mxu0
        %v1546 = vadd.f32 %v1346, %v1545
        %v1547 = vpop.f32.mrb[0].mxu0
        %v1548 = vpop.f32.mrb[0].mxu0
        %v1549 = vadd.f32 %v1346, %v1548
        %v1550 = vpop.f32.mrb[0].mxu0
        %1551 = vmatprep.mubr.bf16.mxu0 0
        %1552 = vmatmul.mubr.bf16.gmra.mrb[0].mxu0 %v1384
        %v1553 = vpop.f32.mrb[0].mxu0
        %v1554 = vadd.f32 %v1346, %v1553
        %v1555 = vpop.f32.mrb[0].mxu0
        %v1556 = vpop.f32.mrb[0].mxu0
        %v1557 = vadd.f32 %v1346, %v1556
        %v1558 = vpop.f32.mrb[0].mxu0
        %1559 = vmatprep.mubr.bf16.mxu0 0
        %1560 = vmatmul.mubr.bf16.gmra.mrb[0].mxu0 %v1387
        %v1561 = vpop.f32.mrb[0].mxu0
        %v1562 = vadd.f32 %v1346, %v1561
        %v1563 = vpop.f32.mrb[0].mxu0
        %v1564 = vpop.f32.mrb[0].mxu0
        %v1565 = vadd.f32 %v1346, %v1564
        %v1566 = vpop.f32.mrb[0].mxu0
        %1567 = vmatprep.mubr.bf16.mxu0 0
        %1568 = vmatmul.mubr.bf16.gmra.mrb[0].mxu0 %v1390
        %v1569 = vpop.f32.mrb[0].mxu0
        %v1570 = vadd.f32 %v1346, %v1569
        %v1571 = vpop.f32.mrb[0].mxu0
        %v1572 = vpop.f32.mrb[0].mxu0
        %v1573 = vadd.f32 %v1346, %v1572
        %v1574 = vpop.f32.mrb[0].mxu0
        %1575 = vmatprep.mubr.bf16.mxu0 0
        %1576 = vmatmul.mubr.bf16.gmra.mrb[0].mxu0 %v1393
        %v1577 = vpop.f32.mrb[0].mxu0
        %v1578 = vadd.f32 %v1346, %v1577
        %v1579 = vpop.f32.mrb[0].mxu0
        %v1580 = vpop.f32.mrb[0].mxu0
        %v1581 = vadd.f32 %v1346, %v1580
        %v1582 = vpop.f32.mrb[0].mxu0
        %1583 = vmatprep.mubr.bf16.mxu0 0
        %1584 = vmatmul.mubr.bf16.gmra.mrb[0].mxu0 %v1396
        %v1585 = vpop.f32.mrb[0].mxu0
        %v1586 = vadd.f32 %v1346, %v1585
        %v1587 = vpop.f32.mrb[0].mxu0
        %v1588 = vpop.f32.mrb[0].mxu0
        %v1589 = vadd.f32 %v1346, %v1588
        %v1590 = vpop.f32.mrb[0].mxu0
        %1591 = vmatprep.mubr.bf16.mxu0 0
        %1592 = vmatmul.mubr.bf16.gmra.mrb[0].mxu0 %v1399
        %v1593 = vpop.f32.mrb[0].mxu0
        %v1594 = vadd.f32 %v1346, %v1593
        %v1595 = vpop.f32.mrb[0].mxu0
        %v1596 = vpop.f32.mrb[0].mxu0
        %v1597 = vadd.f32 %v1346, %v1596
        %v1598 = vpop.f32.mrb[0].mxu0
        %1599 = vmatprep.mubr.bf16.mxu0 0
        %1600 = vmatmul.mubr.bf16.gmra.mrb[0].mxu0 %v1402
        %v1601 = vpop.f32.mrb[0].mxu0
        %v1602 = vadd.f32 %v1346, %v1601
        %v1603 = vpop.f32.mrb[0].mxu0
        %v1604 = vpop.f32.mrb[0].mxu0
        %v1605 = vadd.f32 %v1346, %v1604
        %v1606 = vpop.f32.mrb[0].mxu0
        %1607 = vmatprep.mubr.bf16.mxu0 0
        %1608 = vmatmul.mubr.bf16.gmra.mrb[0].mxu0 %v1405
        %v1609 = vpop.f32.mrb[0].mxu0
        %v1610 = vadd.f32 %v1346, %v1609
        %v1611 = vpop.f32.mrb[0].mxu0
        %v1612 = vpop.f32.mrb[0].mxu0
        %v1613 = vadd.f32 %v1346, %v1612
        %v1614 = vpop.f32.mrb[0].mxu0
        %1615 = vmatprep.mubr.bf16.mxu0 0
        %1616 = vmatmul.mubr.bf16.gmra.mrb[0].mxu0 %v1408
        %v1617 = vpop.f32.mrb[0].mxu0
        %v1618 = vadd.f32 %v1346, %v1617
        %v1619 = vpop.f32.mrb[0].mxu0
        %v1620 = vpop.f32.mrb[0].mxu0
        %v1621 = vadd.f32 %v1346, %v1620
        %v1622 = vpop.f32.mrb[0].mxu0
        %1623 = vmatprep.mubr.bf16.mxu0 0
        %1624 = vmatmul.mubr.bf16.gmra.mrb[0].mxu0 %v1411
        %v1625 = vpop.f32.mrb[0].mxu0
        %v1626 = vadd.f32 %v1346, %v1625
        %v1627 = vpop.f32.mrb[0].mxu0
        %v1628 = vpop.f32.mrb[0].mxu0
        %v1629 = vadd.f32 %v1346, %v1628
        %v1630 = vpop.f32.mrb[0].mxu0
        %1631 = vmatprep.mubr.bf16.mxu0 0
        %1632 = vmatmul.mubr.bf16.gmra.mrb[0].mxu0 %v1414
        %v1633 = vpop.f32.mrb[0].mxu0
        %v1634 = vadd.f32 %v1346, %v1633
        %v1635 = vpop.f32.mrb[0].mxu0
        %v1636 = vpop.f32.mrb[0].mxu0
        %v1637 = vadd.f32 %v1346, %v1636
        %v1638 = vpop.f32.mrb[0].mxu0
        %1639 = vmatprep.mubr.bf16.mxu0 0
        %1640 = vmatmul.mubr.bf16.gmra.mrb[0].mxu0 %v1417
        %v1641 = vpop.f32.mrb[0].mxu0
        %v1642 = vadd.f32 %v1346, %v1641
        %v1643 = vpop.f32.mrb[0].mxu0
        %v1644 = vpop.f32.mrb[0].mxu0
        %v1645 = vadd.f32 %v1346, %v1644
        %v1646 = vpop.f32.mrb[0].mxu0
        %1647 = vmatprep.mubr.bf16.mxu0 0
        %1648 = vmatmul.mubr.bf16.gmra.mrb[0].mxu0 %v1420
        %v1649 = vpop.f32.mrb[0].mxu0
        %v1650 = vadd.f32 %v1346, %v1649
        %v1651 = vpop.f32.mrb[0].mxu0
        %v1652 = vpop.f32.mrb[0].mxu0
        %v1653 = vadd.f32 %v1346, %v1652
        %v1654 = vpop.f32.mrb[0].mxu0
        %1655 = vmatprep.mubr.bf16.mxu0 0
        %1656 = vmatmul.mubr.bf16.gmra.mrb[0].mxu0 %v1423
        %v1657 = vpop.f32.mrb[0].mxu0
        %v1658 = vadd.f32 %v1346, %v1657
        %v1659 = vpop.f32.mrb[0].mxu0
        %v1660 = vpop.f32.mrb[0].mxu0
        %v1661 = vadd.f32 %v1346, %v1660
        %v1662 = vpop.f32.mrb[0].mxu0
        %1663 = vmatprep.mubr.bf16.mxu0 0
        %1664 = vmatmul.mubr.bf16.gmra.mrb[0].mxu0 %v1426
        %v1665 = vpop.f32.mrb[0].mxu0
        %v1666 = vadd.f32 %v1346, %v1665
        %v1667 = vpop.f32.mrb[0].mxu0
        %v1668 = vpop.f32.mrb[0].mxu0
        %v1669 = vadd.f32 %v1346, %v1668
        %v1670 = vpop.f32.mrb[0].mxu0
        %1671 = vmatprep.mubr.bf16.mxu0 0
        %1672 = vmatmul.mubr.bf16.gmra.mrb[0].mxu0 %v1429
        %v1673 = vpop.f32.mrb[0].mxu0
        %v1674 = vadd.f32 %v1346, %v1673
        %v1675 = vpop.f32.mrb[0].mxu0
        %v1676 = vpop.f32.mrb[0].mxu0
        %v1677 = vadd.f32 %v1346, %v1676
        %v1678 = vpop.f32.mrb[0].mxu0
        %1679 = vmatprep.mubr.bf16.mxu0 0
        %1680 = vmatmul.mubr.bf16.gmra.mrb[0].mxu0 %v1432
        %v1681 = vpop.f32.mrb[0].mxu0
        %v1682 = vadd.f32 %v1346, %v1681
        %v1683 = vpop.f32.mrb[0].mxu0
        %v1684 = vpop.f32.mrb[0].mxu0
        %v1685 = vadd.f32 %v1346, %v1684
        %v1686 = vpop.f32.mrb[0].mxu0
        %1687 = vmatprep.mubr.bf16.mxu0 0
        %1688 = vmatmul.mubr.bf16.gmra.mrb[0].mxu0 %v1435
        %v1689 = vpop.f32.mrb[0].mxu0
        %v1690 = vadd.f32 %v1346, %v1689
        %v1691 = vpop.f32.mrb[0].mxu0
        %v1692 = vpop.f32.mrb[0].mxu0
        %v1693 = vadd.f32 %v1346, %v1692
        %v1694 = vpop.f32.mrb[0].mxu0
        %1695 = vmatprep.mubr.bf16.mxu0 0
        %1696 = vmatmul.mubr.bf16.gmra.mrb[0].mxu0 %v1438
        %v1697 = vpop.f32.mrb[0].mxu0
        %v1698 = vadd.f32 %v1346, %v1697
        %v1699 = vpop.f32.mrb[0].mxu0
        %v1700 = vpop.f32.mrb[0].mxu0
        %v1701 = vadd.f32 %v1346, %v1700
        %v1702 = vpop.f32.mrb[0].mxu0
        %1703 = vmatprep.mubr.bf16.mxu0 0
        %1704 = vmatmul.mubr.bf16.gmra.mrb[0].mxu0 %v1441
        %v1705 = vpop.f32.mrb[0].mxu0
        %v1706 = vadd.f32 %v1346, %v1705
        %v1707 = vpop.f32.mrb[0].mxu0
        %v1708 = vpop.f32.mrb[0].mxu0
        %v1709 = vadd.f32 %v1346, %v1708
        %v1710 = vpop.f32.mrb[0].mxu0
        %1711 = vmatprep.mubr.bf16.mxu0 0
        %1712 = vmatmul.mubr.bf16.gmra.mrb[0].mxu0 %v1444
        %v1713 = vpop.f32.mrb[0].mxu0
        %v1714 = vadd.f32 %v1346, %v1713
        %v1715 = vpop.f32.mrb[0].mxu0
        %v1716 = vpop.f32.mrb[0].mxu0
        %v1717 = vadd.f32 %v1346, %v1716
        %v1718 = vpop.f32.mrb[0].mxu0
        %1719 = vmatprep.mubr.bf16.mxu0 0
        %1720 = vmatmul.mubr.bf16.gmra.mrb[0].mxu0 %v1447
        %v1721 = vpop.f32.mrb[0].mxu0
        %v1722 = vadd.f32 %v1346, %v1721
        %v1723 = vpop.f32.mrb[0].mxu0
        %v1724 = vpop.f32.mrb[0].mxu0
        %v1725 = vadd.f32 %v1346, %v1724
        %v1726 = vpop.f32.mrb[0].mxu0
        %1727 = vmatprep.mubr.bf16.mxu0 0
        %1728 = vmatmul.mubr.bf16.gmra.mrb[0].mxu0 %v1450
        %v1729 = vpop.f32.mrb[0].mxu0
        %v1730 = vadd.f32 %v1346, %v1729
        %v1731 = vpop.f32.mrb[0].mxu0
        %v1732 = vpop.f32.mrb[0].mxu0
        %v1733 = vadd.f32 %v1346, %v1732
        %v1734 = vpop.f32.mrb[0].mxu0
        %1735 = vmatprep.mubr.bf16.mxu0 0
        %1736 = vmatmul.mubr.bf16.gmra.mrb[0].mxu0 %v1453
        %v1737 = vpop.f32.mrb[0].mxu0
        %v1738 = vadd.f32 %v1346, %v1737
        %v1739 = vpop.f32.mrb[0].mxu0
        %v1740 = vpop.f32.mrb[0].mxu0
        %v1741 = vadd.f32 %v1346, %v1740
        %v1742 = vpop.f32.mrb[0].mxu0
        %1743 = vdwg.mxu0
        %vm1744 = vcmask 31744
        %1745 = vst.msk [vmem:[%s226] sm:$0xff] %vm1744, %v1490
        %1746 = vst.msk [vmem:[%s226 + $0x8] sm:$0xff] %vm1744, %v1493
        %1747 = vst.msk [vmem:[%s226 + $0x10] sm:$0xff] %vm1744, %v1498
        %1748 = vst.msk [vmem:[%s226 + $0x18] sm:$0xff] %vm1744, %v1501
        %1749 = vst.msk [vmem:[%s226 + $0x20] sm:$0xff] %vm1744, %v1506
        %1750 = vst.msk [vmem:[%s226 + $0x28] sm:$0xff] %vm1744, %v1509
        %1751 = vst.msk [vmem:[%s226 + $0x30] sm:$0xff] %vm1744, %v1514
        %1752 = vst.msk [vmem:[%s226 + $0x38] sm:$0xff] %vm1744, %v1517
        %1753 = vst.msk [vmem:[%s226 + $0x40] sm:$0xff] %vm1744, %v1522
        %1754 = vst.msk [vmem:[%s226 + $0x48] sm:$0xff] %vm1744, %v1525
        %1755 = vst.msk [vmem:[%s226 + $0x50] sm:$0xff] %vm1744, %v1530
        %1756 = vst.msk [vmem:[%s226 + $0x58] sm:$0xff] %vm1744, %v1533
        %1757 = vst.msk [vmem:[%s226 + $0x60] sm:$0xff] %vm1744, %v1538
        %1758 = vst.msk [vmem:[%s226 + $0x68] sm:$0xff] %vm1744, %v1541
        %1759 = vst.msk [vmem:[%s226 + $0x70] sm:$0xff] %vm1744, %v1546
        %1760 = vst.msk [vmem:[%s226 + $0x78] sm:$0xff] %vm1744, %v1549
        %1761 = vst.msk [vmem:[%s226 + $0x80] sm:$0xff] %vm1744, %v1554
        %1762 = vst.msk [vmem:[%s226 + $0x88] sm:$0xff] %vm1744, %v1557
        %1763 = vst.msk [vmem:[%s226 + $0x90] sm:$0xff] %vm1744, %v1562
        %1764 = vst.msk [vmem:[%s226 + $0x98] sm:$0xff] %vm1744, %v1565
        %1765 = vst.msk [vmem:[%s226 + $0xa0] sm:$0xff] %vm1744, %v1570
        %1766 = vst.msk [vmem:[%s226 + $0xa8] sm:$0xff] %vm1744, %v1573
        %1767 = vst.msk [vmem:[%s226 + $0xb0] sm:$0xff] %vm1744, %v1578
        %1768 = vst.msk [vmem:[%s226 + $0xb8] sm:$0xff] %vm1744, %v1581
        %1769 = vst.msk [vmem:[%s226 + $0xc0] sm:$0xff] %vm1744, %v1586
        %1770 = vst.msk [vmem:[%s226 + $0xc8] sm:$0xff] %vm1744, %v1589
        %1771 = vst.msk [vmem:[%s226 + $0xd0] sm:$0xff] %vm1744, %v1594
        %1772 = vst.msk [vmem:[%s226 + $0xd8] sm:$0xff] %vm1744, %v1597
        %1773 = vst.msk [vmem:[%s226 + $0xe0] sm:$0xff] %vm1744, %v1602
        %1774 = vst.msk [vmem:[%s226 + $0xe8] sm:$0xff] %vm1744, %v1605
        %1775 = vst.msk [vmem:[%s226 + $0xf0] sm:$0xff] %vm1744, %v1610
        %1776 = vst.msk [vmem:[%s226 + $0xf8] sm:$0xff] %vm1744, %v1613
        %1777 = vst.msk [vmem:[%s226 + $0x100] sm:$0xff] %vm1744, %v1618
        %1778 = vst.msk [vmem:[%s226 + $0x108] sm:$0xff] %vm1744, %v1621
        %1779 = vst.msk [vmem:[%s226 + $0x110] sm:$0xff] %vm1744, %v1626
        %1780 = vst.msk [vmem:[%s226 + $0x118] sm:$0xff] %vm1744, %v1629
        %1781 = vst.msk [vmem:[%s226 + $0x120] sm:$0xff] %vm1744, %v1634
        %1782 = vst.msk [vmem:[%s226 + $0x128] sm:$0xff] %vm1744, %v1637
        %1783 = vst.msk [vmem:[%s226 + $0x130] sm:$0xff] %vm1744, %v1642
        %1784 = vst.msk [vmem:[%s226 + $0x138] sm:$0xff] %vm1744, %v1645
        %1785 = vst.msk [vmem:[%s226 + $0x140] sm:$0xff] %vm1744, %v1650
        %1786 = vst.msk [vmem:[%s226 + $0x148] sm:$0xff] %vm1744, %v1653
        %1787 = vst.msk [vmem:[%s226 + $0x150] sm:$0xff] %vm1744, %v1658
        %1788 = vst.msk [vmem:[%s226 + $0x158] sm:$0xff] %vm1744, %v1661
        %1789 = vst.msk [vmem:[%s226 + $0x160] sm:$0xff] %vm1744, %v1666
        %1790 = vst.msk [vmem:[%s226 + $0x168] sm:$0xff] %vm1744, %v1669
        %1791 = vst.msk [vmem:[%s226 + $0x170] sm:$0xff] %vm1744, %v1674
        %1792 = vst.msk [vmem:[%s226 + $0x178] sm:$0xff] %vm1744, %v1677
        %1793 = vst.msk [vmem:[%s226 + $0x180] sm:$0xff] %vm1744, %v1682
        %1794 = vst.msk [vmem:[%s226 + $0x188] sm:$0xff] %vm1744, %v1685
        %1795 = vst.msk [vmem:[%s226 + $0x190] sm:$0xff] %vm1744, %v1690
        %1796 = vst.msk [vmem:[%s226 + $0x198] sm:$0xff] %vm1744, %v1693
        %1797 = vst.msk [vmem:[%s226 + $0x1a0] sm:$0xff] %vm1744, %v1698
        %1798 = vst.msk [vmem:[%s226 + $0x1a8] sm:$0xff] %vm1744, %v1701
        %1799 = vst.msk [vmem:[%s226 + $0x1b0] sm:$0xff] %vm1744, %v1706
        %1800 = vst.msk [vmem:[%s226 + $0x1b8] sm:$0xff] %vm1744, %v1709
        %1801 = vst.msk [vmem:[%s226 + $0x1c0] sm:$0xff] %vm1744, %v1714
        %1802 = vst.msk [vmem:[%s226 + $0x1c8] sm:$0xff] %vm1744, %v1717
        %1803 = vst.msk [vmem:[%s226 + $0x1d0] sm:$0xff] %vm1744, %v1722
        %1804 = vst.msk [vmem:[%s226 + $0x1d8] sm:$0xff] %vm1744, %v1725
        %1805 = vst.msk [vmem:[%s226 + $0x1e0] sm:$0xff] %vm1744, %v1730
        %1806 = vst.msk [vmem:[%s226 + $0x1e8] sm:$0xff] %vm1744, %v1733
        %1807 = vst.msk [vmem:[%s226 + $0x1f0] sm:$0xff] %vm1744, %v1738
        %1808 = vst.msk [vmem:[%s226 + $0x1f8] sm:$0xff] %vm1744, %v1741
        %s1809 = sand.u32 %s134, 1
        %s1810 = sand.u32 %s134, 1
        %s1811 = smul.addr %s1810, 512
        %s1812 = scalar_lea.vmem [#allocation2], %s1811
        // Predicated region
        $region41: #{generic_network_forward.1} parent=39 // pred_check
          %p1813 = pneg %p144
        $region42: #{generic_network_forward.1} parent=39 // pred_check_branch
          %1815 = sbr.rel (%p1813) target = $region44
        $region43: #{generic_network_forward.1} parent=39 // pred_region
          %s1816 = smul.u32 64, %s16
          %s1817 = ssub.s32 125, %s1816
          %p1818 = scmp.lt.s32.totalorder %s1817, 64
          %s1819 = scalar_select %p1818, %s1817, 64
          %s1820 = smul.u32 128, %s1819
          %p1821 = scmp.ne.s32.totalorder 0, %s1820
          %s1822 = smul.addr %s1816, 8
          %s1823 = scalar_lea.vmem %s5, %s1822
          // Predicated region
          $region45: #{generic_network_forward.1} parent=43 // pred_check
            %p1824 = pneg %p1821
          $region46: #{generic_network_forward.1} parent=43 // pred_check_branch
            %1826 = sbr.rel (%p1824) target = $region48
          $region47: #{generic_network_forward.1} parent=43 // pred_region
            // Predicated region
            $region49: #{generic_network_forward.1} parent=47 // pred_check
              _
            $region50: #{generic_network_forward.1} parent=47 // pred_check_branch
              %1828 = sbr.rel (0) target = $region52
            $region51: #{generic_network_forward.1} parent=47 // pred_region
              // Predicated region
              $region71: #{generic_network_forward.1} parent=51 // pred_check
                _
              $region72: #{generic_network_forward.1} parent=51 // pred_check_branch
                %2003 = sbr.rel (0) target = $region74
              $region73: #{generic_network_forward.1} parent=51 // pred_region
                %s2004 = sshrl.u32 %s1819, 6
                // While loop
                $region75: #{generic_network_forward.1} parent=73 // loop_pre_header
                  _
                $region76: #{generic_network_forward.1} parent=73 // loop_header
                  %s2006 = sphi 0, %s2008
                  %p2007 = scmp.ge.s32.totalorder %s2006, %s2004
                  %s2011 = sphi 0, %s2144
                  %s2012 = sphi %s1812, %s2147
                  %s2013 = sphi %s1823, %s2148
                $region77: #{generic_network_forward.1} parent=73 // loop_header_branch
                  %2010 = sbr.rel (%p2007) target = $region81
                $region78: #{generic_network_forward.1} parent=73 // loop_body
                  %v2014 = vld [vmem:[%s2012] sm:$0xff]
                  %2015 = vst [vmem:[%s2013] sm:$0xff] %v2014
                  %v2016 = vld [vmem:[%s2012 + $0x8] sm:$0xff]
                  %2017 = vst [vmem:[%s2013 + $0x8] sm:$0xff] %v2016
                  %v2018 = vld [vmem:[%s2012 + $0x10] sm:$0xff]
                  %2019 = vst [vmem:[%s2013 + $0x10] sm:$0xff] %v2018
                  %v2020 = vld [vmem:[%s2012 + $0x18] sm:$0xff]
                  %2021 = vst [vmem:[%s2013 + $0x18] sm:$0xff] %v2020
                  %v2022 = vld [vmem:[%s2012 + $0x20] sm:$0xff]
                  %2023 = vst [vmem:[%s2013 + $0x20] sm:$0xff] %v2022
                  %v2024 = vld [vmem:[%s2012 + $0x28] sm:$0xff]
                  %2025 = vst [vmem:[%s2013 + $0x28] sm:$0xff] %v2024
                  %v2026 = vld [vmem:[%s2012 + $0x30] sm:$0xff]
                  %2027 = vst [vmem:[%s2013 + $0x30] sm:$0xff] %v2026
                  %v2028 = vld [vmem:[%s2012 + $0x38] sm:$0xff]
                  %2029 = vst [vmem:[%s2013 + $0x38] sm:$0xff] %v2028
                  %v2030 = vld [vmem:[%s2012 + $0x40] sm:$0xff]
                  %2031 = vst [vmem:[%s2013 + $0x40] sm:$0xff] %v2030
                  %v2032 = vld [vmem:[%s2012 + $0x48] sm:$0xff]
                  %2033 = vst [vmem:[%s2013 + $0x48] sm:$0xff] %v2032
                  %v2034 = vld [vmem:[%s2012 + $0x50] sm:$0xff]
                  %2035 = vst [vmem:[%s2013 + $0x50] sm:$0xff] %v2034
                  %v2036 = vld [vmem:[%s2012 + $0x58] sm:$0xff]
                  %2037 = vst [vmem:[%s2013 + $0x58] sm:$0xff] %v2036
                  %v2038 = vld [vmem:[%s2012 + $0x60] sm:$0xff]
                  %2039 = vst [vmem:[%s2013 + $0x60] sm:$0xff] %v2038
                  %v2040 = vld [vmem:[%s2012 + $0x68] sm:$0xff]
                  %2041 = vst [vmem:[%s2013 + $0x68] sm:$0xff] %v2040
                  %v2042 = vld [vmem:[%s2012 + $0x70] sm:$0xff]
                  %2043 = vst [vmem:[%s2013 + $0x70] sm:$0xff] %v2042
                  %v2044 = vld [vmem:[%s2012 + $0x78] sm:$0xff]
                  %2045 = vst [vmem:[%s2013 + $0x78] sm:$0xff] %v2044
                  %v2046 = vld [vmem:[%s2012 + $0x80] sm:$0xff]
                  %2047 = vst [vmem:[%s2013 + $0x80] sm:$0xff] %v2046
                  %v2048 = vld [vmem:[%s2012 + $0x88] sm:$0xff]
                  %2049 = vst [vmem:[%s2013 + $0x88] sm:$0xff] %v2048
                  %v2050 = vld [vmem:[%s2012 + $0x90] sm:$0xff]
                  %2051 = vst [vmem:[%s2013 + $0x90] sm:$0xff] %v2050
                  %v2052 = vld [vmem:[%s2012 + $0x98] sm:$0xff]
                  %2053 = vst [vmem:[%s2013 + $0x98] sm:$0xff] %v2052
                  %v2054 = vld [vmem:[%s2012 + $0xa0] sm:$0xff]
                  %2055 = vst [vmem:[%s2013 + $0xa0] sm:$0xff] %v2054
                  %v2056 = vld [vmem:[%s2012 + $0xa8] sm:$0xff]
                  %2057 = vst [vmem:[%s2013 + $0xa8] sm:$0xff] %v2056
                  %v2058 = vld [vmem:[%s2012 + $0xb0] sm:$0xff]
                  %2059 = vst [vmem:[%s2013 + $0xb0] sm:$0xff] %v2058
                  %v2060 = vld [vmem:[%s2012 + $0xb8] sm:$0xff]
                  %2061 = vst [vmem:[%s2013 + $0xb8] sm:$0xff] %v2060
                  %v2062 = vld [vmem:[%s2012 + $0xc0] sm:$0xff]
                  %2063 = vst [vmem:[%s2013 + $0xc0] sm:$0xff] %v2062
                  %v2064 = vld [vmem:[%s2012 + $0xc8] sm:$0xff]
                  %2065 = vst [vmem:[%s2013 + $0xc8] sm:$0xff] %v2064
                  %v2066 = vld [vmem:[%s2012 + $0xd0] sm:$0xff]
                  %2067 = vst [vmem:[%s2013 + $0xd0] sm:$0xff] %v2066
                  %v2068 = vld [vmem:[%s2012 + $0xd8] sm:$0xff]
                  %2069 = vst [vmem:[%s2013 + $0xd8] sm:$0xff] %v2068
                  %v2070 = vld [vmem:[%s2012 + $0xe0] sm:$0xff]
                  %2071 = vst [vmem:[%s2013 + $0xe0] sm:$0xff] %v2070
                  %v2072 = vld [vmem:[%s2012 + $0xe8] sm:$0xff]
                  %2073 = vst [vmem:[%s2013 + $0xe8] sm:$0xff] %v2072
                  %v2074 = vld [vmem:[%s2012 + $0xf0] sm:$0xff]
                  %2075 = vst [vmem:[%s2013 + $0xf0] sm:$0xff] %v2074
                  %v2076 = vld [vmem:[%s2012 + $0xf8] sm:$0xff]
                  %2077 = vst [vmem:[%s2013 + $0xf8] sm:$0xff] %v2076
                  %v2078 = vld [vmem:[%s2012 + $0x100] sm:$0xff]
                  %2079 = vst [vmem:[%s2013 + $0x100] sm:$0xff] %v2078
                  %v2080 = vld [vmem:[%s2012 + $0x108] sm:$0xff]
                  %2081 = vst [vmem:[%s2013 + $0x108] sm:$0xff] %v2080
                  %v2082 = vld [vmem:[%s2012 + $0x110] sm:$0xff]
                  %2083 = vst [vmem:[%s2013 + $0x110] sm:$0xff] %v2082
                  %v2084 = vld [vmem:[%s2012 + $0x118] sm:$0xff]
                  %2085 = vst [vmem:[%s2013 + $0x118] sm:$0xff] %v2084
                  %v2086 = vld [vmem:[%s2012 + $0x120] sm:$0xff]
                  %2087 = vst [vmem:[%s2013 + $0x120] sm:$0xff] %v2086
                  %v2088 = vld [vmem:[%s2012 + $0x128] sm:$0xff]
                  %2089 = vst [vmem:[%s2013 + $0x128] sm:$0xff] %v2088
                  %v2090 = vld [vmem:[%s2012 + $0x130] sm:$0xff]
                  %2091 = vst [vmem:[%s2013 + $0x130] sm:$0xff] %v2090
                  %v2092 = vld [vmem:[%s2012 + $0x138] sm:$0xff]
                  %2093 = vst [vmem:[%s2013 + $0x138] sm:$0xff] %v2092
                  %v2094 = vld [vmem:[%s2012 + $0x140] sm:$0xff]
                  %2095 = vst [vmem:[%s2013 + $0x140] sm:$0xff] %v2094
                  %v2096 = vld [vmem:[%s2012 + $0x148] sm:$0xff]
                  %2097 = vst [vmem:[%s2013 + $0x148] sm:$0xff] %v2096
                  %v2098 = vld [vmem:[%s2012 + $0x150] sm:$0xff]
                  %2099 = vst [vmem:[%s2013 + $0x150] sm:$0xff] %v2098
                  %v2100 = vld [vmem:[%s2012 + $0x158] sm:$0xff]
                  %2101 = vst [vmem:[%s2013 + $0x158] sm:$0xff] %v2100
                  %v2102 = vld [vmem:[%s2012 + $0x160] sm:$0xff]
                  %2103 = vst [vmem:[%s2013 + $0x160] sm:$0xff] %v2102
                  %v2104 = vld [vmem:[%s2012 + $0x168] sm:$0xff]
                  %2105 = vst [vmem:[%s2013 + $0x168] sm:$0xff] %v2104
                  %v2106 = vld [vmem:[%s2012 + $0x170] sm:$0xff]
                  %2107 = vst [vmem:[%s2013 + $0x170] sm:$0xff] %v2106
                  %v2108 = vld [vmem:[%s2012 + $0x178] sm:$0xff]
                  %2109 = vst [vmem:[%s2013 + $0x178] sm:$0xff] %v2108
                  %v2110 = vld [vmem:[%s2012 + $0x180] sm:$0xff]
                  %2111 = vst [vmem:[%s2013 + $0x180] sm:$0xff] %v2110
                  %v2112 = vld [vmem:[%s2012 + $0x188] sm:$0xff]
                  %2113 = vst [vmem:[%s2013 + $0x188] sm:$0xff] %v2112
                  %v2114 = vld [vmem:[%s2012 + $0x190] sm:$0xff]
                  %2115 = vst [vmem:[%s2013 + $0x190] sm:$0xff] %v2114
                  %v2116 = vld [vmem:[%s2012 + $0x198] sm:$0xff]
                  %2117 = vst [vmem:[%s2013 + $0x198] sm:$0xff] %v2116
                  %v2118 = vld [vmem:[%s2012 + $0x1a0] sm:$0xff]
                  %2119 = vst [vmem:[%s2013 + $0x1a0] sm:$0xff] %v2118
                  %v2120 = vld [vmem:[%s2012 + $0x1a8] sm:$0xff]
                  %2121 = vst [vmem:[%s2013 + $0x1a8] sm:$0xff] %v2120
                  %v2122 = vld [vmem:[%s2012 + $0x1b0] sm:$0xff]
                  %2123 = vst [vmem:[%s2013 + $0x1b0] sm:$0xff] %v2122
                  %v2124 = vld [vmem:[%s2012 + $0x1b8] sm:$0xff]
                  %2125 = vst [vmem:[%s2013 + $0x1b8] sm:$0xff] %v2124
                  %v2126 = vld [vmem:[%s2012 + $0x1c0] sm:$0xff]
                  %2127 = vst [vmem:[%s2013 + $0x1c0] sm:$0xff] %v2126
                  %v2128 = vld [vmem:[%s2012 + $0x1c8] sm:$0xff]
                  %2129 = vst [vmem:[%s2013 + $0x1c8] sm:$0xff] %v2128
                  %v2130 = vld [vmem:[%s2012 + $0x1d0] sm:$0xff]
                  %2131 = vst [vmem:[%s2013 + $0x1d0] sm:$0xff] %v2130
                  %v2132 = vld [vmem:[%s2012 + $0x1d8] sm:$0xff]
                  %2133 = vst [vmem:[%s2013 + $0x1d8] sm:$0xff] %v2132
                  %v2134 = vld [vmem:[%s2012 + $0x1e0] sm:$0xff]
                  %2135 = vst [vmem:[%s2013 + $0x1e0] sm:$0xff] %v2134
                  %v2136 = vld [vmem:[%s2012 + $0x1e8] sm:$0xff]
                  %2137 = vst [vmem:[%s2013 + $0x1e8] sm:$0xff] %v2136
                  %v2138 = vld [vmem:[%s2012 + $0x1f0] sm:$0xff]
                  %2139 = vst [vmem:[%s2013 + $0x1f0] sm:$0xff] %v2138
                  %v2140 = vld [vmem:[%s2012 + $0x1f8] sm:$0xff]
                  %2141 = vst [vmem:[%s2013 + $0x1f8] sm:$0xff] %v2140
                  %s2142 = sadd.s32 1, %s2011
                  %p2143 = scmp.ge.s32.totalorder %s2142, %s2004
                  %s2144 = scalar_select %p2143, 0, %s2142
                  %s2145 = smul.u32 %s2144, 512
                  %s2146 = smul.u32 %s2144, 512
                  %s2147 = scalar_lea.vmem %s1812, %s2145 [#allocation2]
                  %s2148 = scalar_lea.vmem %s1823, %s2146
                $region79: #{generic_network_forward.1} parent=73 // loop_footer
                  %s2008 = sadd.s32 %s2006, 1
                $region80: #{generic_network_forward.1} parent=73 // loop_footer_branch
                  %2005 = sbr.rel target = $region76
                $region81: #{generic_network_forward.1} parent=73 // loop_exit
                  _
                %s2149 = sshrl.u32 %s1819, 6
                %s2150 = sand.u32 %s1819, 63
                %s2151 = smul.u32 %s2149, 64
                %s2152 = smul.u32 8, %s2151
                %s2153 = scalar_lea.vmem %s1812, %s2152 [#allocation2]
                %s2154 = smul.u32 8, %s2151
                %s2155 = scalar_lea.vmem %s1823, %s2154
                // While loop
                $region82: #{generic_network_forward.1} parent=73 // loop_pre_header
                  _
                $region83: #{generic_network_forward.1} parent=73 // loop_header
                  %s2157 = sphi 0, %s2159
                  %p2158 = scmp.ge.s32.totalorder %s2157, %s2150
                  %s2162 = sphi 0, %s2169
                  %s2163 = sphi %s2153, %s2172
                  %s2164 = sphi %s2155, %s2173
                $region84: #{generic_network_forward.1} parent=73 // loop_header_branch
                  %2161 = sbr.rel (%p2158) target = $region88
                $region85: #{generic_network_forward.1} parent=73 // loop_body
                  %v2165 = vld [vmem:[%s2163] sm:$0xff]
                  %2166 = vst [vmem:[%s2164] sm:$0xff] %v2165
                  %s2167 = sadd.s32 1, %s2162
                  %p2168 = scmp.ge.s32.totalorder %s2167, %s2150
                  %s2169 = scalar_select %p2168, 0, %s2167
                  %s2170 = smul.u32 %s2169, 8
                  %s2171 = smul.u32 %s2169, 8
                  %s2172 = scalar_lea.vmem %s2153, %s2170 [#allocation2]
                  %s2173 = scalar_lea.vmem %s2155, %s2171
                $region86: #{generic_network_forward.1} parent=73 // loop_footer
                  %s2159 = sadd.s32 %s2157, 1
                $region87: #{generic_network_forward.1} parent=73 // loop_footer_branch
                  %2156 = sbr.rel target = $region83
                $region88: #{generic_network_forward.1} parent=73 // loop_exit
                  _
              $region74: #{generic_network_forward.1} parent=51 // pred_fallthru
                _
              // Predicated region
              $region89: #{generic_network_forward.1} parent=51 // pred_check
                _
              $region90: #{generic_network_forward.1} parent=51 // pred_check_branch
                %2175 = sbr.rel target = $region92
              $region91: #{generic_network_forward.1} parent=51 // pred_region
                _
              $region92: #{generic_network_forward.1} parent=51 // pred_fallthru
                _
            $region52: #{generic_network_forward.1} parent=47 // pred_fallthru
              _
            // Predicated region
            $region53: #{generic_network_forward.1} parent=47 // pred_check
              _
            $region54: #{generic_network_forward.1} parent=47 // pred_check_branch
              %1830 = sbr.rel target = $region56
            $region55: #{generic_network_forward.1} parent=47 // pred_region
              %s1832 = sshrl.u32 %s1819, 6
              // While loop
              $region57: #{generic_network_forward.1} parent=55 // loop_pre_header
                _
              $region58: #{generic_network_forward.1} parent=55 // loop_header
                %s1834 = sphi 0, %s1836
                %p1835 = scmp.ge.s32.totalorder %s1834, %s1832
                %s1839 = sphi 0, %s1972
                %s1840 = sphi %s1812, %s1975
                %s1841 = sphi %s1823, %s1976
              $region59: #{generic_network_forward.1} parent=55 // loop_header_branch
                %1838 = sbr.rel (%p1835) target = $region63
              $region60: #{generic_network_forward.1} parent=55 // loop_body
                %v1842 = vld [vmem:[%s1840] sm:$0xff]
                %1843 = vst [vmem:[%s1841] sm:$0xff] %v1842
                %v1844 = vld [vmem:[%s1840 + $0x8] sm:$0xff]
                %1845 = vst [vmem:[%s1841 + $0x8] sm:$0xff] %v1844
                %v1846 = vld [vmem:[%s1840 + $0x10] sm:$0xff]
                %1847 = vst [vmem:[%s1841 + $0x10] sm:$0xff] %v1846
                %v1848 = vld [vmem:[%s1840 + $0x18] sm:$0xff]
                %1849 = vst [vmem:[%s1841 + $0x18] sm:$0xff] %v1848
                %v1850 = vld [vmem:[%s1840 + $0x20] sm:$0xff]
                %1851 = vst [vmem:[%s1841 + $0x20] sm:$0xff] %v1850
                %v1852 = vld [vmem:[%s1840 + $0x28] sm:$0xff]
                %1853 = vst [vmem:[%s1841 + $0x28] sm:$0xff] %v1852
                %v1854 = vld [vmem:[%s1840 + $0x30] sm:$0xff]
                %1855 = vst [vmem:[%s1841 + $0x30] sm:$0xff] %v1854
                %v1856 = vld [vmem:[%s1840 + $0x38] sm:$0xff]
                %1857 = vst [vmem:[%s1841 + $0x38] sm:$0xff] %v1856
                %v1858 = vld [vmem:[%s1840 + $0x40] sm:$0xff]
                %1859 = vst [vmem:[%s1841 + $0x40] sm:$0xff] %v1858
                %v1860 = vld [vmem:[%s1840 + $0x48] sm:$0xff]
                %1861 = vst [vmem:[%s1841 + $0x48] sm:$0xff] %v1860
                %v1862 = vld [vmem:[%s1840 + $0x50] sm:$0xff]
                %1863 = vst [vmem:[%s1841 + $0x50] sm:$0xff] %v1862
                %v1864 = vld [vmem:[%s1840 + $0x58] sm:$0xff]
                %1865 = vst [vmem:[%s1841 + $0x58] sm:$0xff] %v1864
                %v1866 = vld [vmem:[%s1840 + $0x60] sm:$0xff]
                %1867 = vst [vmem:[%s1841 + $0x60] sm:$0xff] %v1866
                %v1868 = vld [vmem:[%s1840 + $0x68] sm:$0xff]
                %1869 = vst [vmem:[%s1841 + $0x68] sm:$0xff] %v1868
                %v1870 = vld [vmem:[%s1840 + $0x70] sm:$0xff]
                %1871 = vst [vmem:[%s1841 + $0x70] sm:$0xff] %v1870
                %v1872 = vld [vmem:[%s1840 + $0x78] sm:$0xff]
                %1873 = vst [vmem:[%s1841 + $0x78] sm:$0xff] %v1872
                %v1874 = vld [vmem:[%s1840 + $0x80] sm:$0xff]
                %1875 = vst [vmem:[%s1841 + $0x80] sm:$0xff] %v1874
                %v1876 = vld [vmem:[%s1840 + $0x88] sm:$0xff]
                %1877 = vst [vmem:[%s1841 + $0x88] sm:$0xff] %v1876
                %v1878 = vld [vmem:[%s1840 + $0x90] sm:$0xff]
                %1879 = vst [vmem:[%s1841 + $0x90] sm:$0xff] %v1878
                %v1880 = vld [vmem:[%s1840 + $0x98] sm:$0xff]
                %1881 = vst [vmem:[%s1841 + $0x98] sm:$0xff] %v1880
                %v1882 = vld [vmem:[%s1840 + $0xa0] sm:$0xff]
                %1883 = vst [vmem:[%s1841 + $0xa0] sm:$0xff] %v1882
                %v1884 = vld [vmem:[%s1840 + $0xa8] sm:$0xff]
                %1885 = vst [vmem:[%s1841 + $0xa8] sm:$0xff] %v1884
                %v1886 = vld [vmem:[%s1840 + $0xb0] sm:$0xff]
                %1887 = vst [vmem:[%s1841 + $0xb0] sm:$0xff] %v1886
                %v1888 = vld [vmem:[%s1840 + $0xb8] sm:$0xff]
                %1889 = vst [vmem:[%s1841 + $0xb8] sm:$0xff] %v1888
                %v1890 = vld [vmem:[%s1840 + $0xc0] sm:$0xff]
                %1891 = vst [vmem:[%s1841 + $0xc0] sm:$0xff] %v1890
                %v1892 = vld [vmem:[%s1840 + $0xc8] sm:$0xff]
                %1893 = vst [vmem:[%s1841 + $0xc8] sm:$0xff] %v1892
                %v1894 = vld [vmem:[%s1840 + $0xd0] sm:$0xff]
                %1895 = vst [vmem:[%s1841 + $0xd0] sm:$0xff] %v1894
                %v1896 = vld [vmem:[%s1840 + $0xd8] sm:$0xff]
                %1897 = vst [vmem:[%s1841 + $0xd8] sm:$0xff] %v1896
                %v1898 = vld [vmem:[%s1840 + $0xe0] sm:$0xff]
                %1899 = vst [vmem:[%s1841 + $0xe0] sm:$0xff] %v1898
                %v1900 = vld [vmem:[%s1840 + $0xe8] sm:$0xff]
                %1901 = vst [vmem:[%s1841 + $0xe8] sm:$0xff] %v1900
                %v1902 = vld [vmem:[%s1840 + $0xf0] sm:$0xff]
                %1903 = vst [vmem:[%s1841 + $0xf0] sm:$0xff] %v1902
                %v1904 = vld [vmem:[%s1840 + $0xf8] sm:$0xff]
                %1905 = vst [vmem:[%s1841 + $0xf8] sm:$0xff] %v1904
                %v1906 = vld [vmem:[%s1840 + $0x100] sm:$0xff]
                %1907 = vst [vmem:[%s1841 + $0x100] sm:$0xff] %v1906
                %v1908 = vld [vmem:[%s1840 + $0x108] sm:$0xff]
                %1909 = vst [vmem:[%s1841 + $0x108] sm:$0xff] %v1908
                %v1910 = vld [vmem:[%s1840 + $0x110] sm:$0xff]
                %1911 = vst [vmem:[%s1841 + $0x110] sm:$0xff] %v1910
                %v1912 = vld [vmem:[%s1840 + $0x118] sm:$0xff]
                %1913 = vst [vmem:[%s1841 + $0x118] sm:$0xff] %v1912
                %v1914 = vld [vmem:[%s1840 + $0x120] sm:$0xff]
                %1915 = vst [vmem:[%s1841 + $0x120] sm:$0xff] %v1914
                %v1916 = vld [vmem:[%s1840 + $0x128] sm:$0xff]
                %1917 = vst [vmem:[%s1841 + $0x128] sm:$0xff] %v1916
                %v1918 = vld [vmem:[%s1840 + $0x130] sm:$0xff]
                %1919 = vst [vmem:[%s1841 + $0x130] sm:$0xff] %v1918
                %v1920 = vld [vmem:[%s1840 + $0x138] sm:$0xff]
                %1921 = vst [vmem:[%s1841 + $0x138] sm:$0xff] %v1920
                %v1922 = vld [vmem:[%s1840 + $0x140] sm:$0xff]
                %1923 = vst [vmem:[%s1841 + $0x140] sm:$0xff] %v1922
                %v1924 = vld [vmem:[%s1840 + $0x148] sm:$0xff]
                %1925 = vst [vmem:[%s1841 + $0x148] sm:$0xff] %v1924
                %v1926 = vld [vmem:[%s1840 + $0x150] sm:$0xff]
                %1927 = vst [vmem:[%s1841 + $0x150] sm:$0xff] %v1926
                %v1928 = vld [vmem:[%s1840 + $0x158] sm:$0xff]
                %1929 = vst [vmem:[%s1841 + $0x158] sm:$0xff] %v1928
                %v1930 = vld [vmem:[%s1840 + $0x160] sm:$0xff]
                %1931 = vst [vmem:[%s1841 + $0x160] sm:$0xff] %v1930
                %v1932 = vld [vmem:[%s1840 + $0x168] sm:$0xff]
                %1933 = vst [vmem:[%s1841 + $0x168] sm:$0xff] %v1932
                %v1934 = vld [vmem:[%s1840 + $0x170] sm:$0xff]
                %1935 = vst [vmem:[%s1841 + $0x170] sm:$0xff] %v1934
                %v1936 = vld [vmem:[%s1840 + $0x178] sm:$0xff]
                %1937 = vst [vmem:[%s1841 + $0x178] sm:$0xff] %v1936
                %v1938 = vld [vmem:[%s1840 + $0x180] sm:$0xff]
                %1939 = vst [vmem:[%s1841 + $0x180] sm:$0xff] %v1938
                %v1940 = vld [vmem:[%s1840 + $0x188] sm:$0xff]
                %1941 = vst [vmem:[%s1841 + $0x188] sm:$0xff] %v1940
                %v1942 = vld [vmem:[%s1840 + $0x190] sm:$0xff]
                %1943 = vst [vmem:[%s1841 + $0x190] sm:$0xff] %v1942
                %v1944 = vld [vmem:[%s1840 + $0x198] sm:$0xff]
                %1945 = vst [vmem:[%s1841 + $0x198] sm:$0xff] %v1944
                %v1946 = vld [vmem:[%s1840 + $0x1a0] sm:$0xff]
                %1947 = vst [vmem:[%s1841 + $0x1a0] sm:$0xff] %v1946
                %v1948 = vld [vmem:[%s1840 + $0x1a8] sm:$0xff]
                %1949 = vst [vmem:[%s1841 + $0x1a8] sm:$0xff] %v1948
                %v1950 = vld [vmem:[%s1840 + $0x1b0] sm:$0xff]
                %1951 = vst [vmem:[%s1841 + $0x1b0] sm:$0xff] %v1950
                %v1952 = vld [vmem:[%s1840 + $0x1b8] sm:$0xff]
                %1953 = vst [vmem:[%s1841 + $0x1b8] sm:$0xff] %v1952
                %v1954 = vld [vmem:[%s1840 + $0x1c0] sm:$0xff]
                %1955 = vst [vmem:[%s1841 + $0x1c0] sm:$0xff] %v1954
                %v1956 = vld [vmem:[%s1840 + $0x1c8] sm:$0xff]
                %1957 = vst [vmem:[%s1841 + $0x1c8] sm:$0xff] %v1956
                %v1958 = vld [vmem:[%s1840 + $0x1d0] sm:$0xff]
                %1959 = vst [vmem:[%s1841 + $0x1d0] sm:$0xff] %v1958
                %v1960 = vld [vmem:[%s1840 + $0x1d8] sm:$0xff]
                %1961 = vst [vmem:[%s1841 + $0x1d8] sm:$0xff] %v1960
                %v1962 = vld [vmem:[%s1840 + $0x1e0] sm:$0xff]
                %1963 = vst [vmem:[%s1841 + $0x1e0] sm:$0xff] %v1962
                %v1964 = vld [vmem:[%s1840 + $0x1e8] sm:$0xff]
                %1965 = vst [vmem:[%s1841 + $0x1e8] sm:$0xff] %v1964
                %v1966 = vld [vmem:[%s1840 + $0x1f0] sm:$0xff]
                %1967 = vst [vmem:[%s1841 + $0x1f0] sm:$0xff] %v1966
                %v1968 = vld [vmem:[%s1840 + $0x1f8] sm:$0xff]
                %1969 = vst [vmem:[%s1841 + $0x1f8] sm:$0xff] %v1968
                %s1970 = sadd.s32 1, %s1839
                %p1971 = scmp.ge.s32.totalorder %s1970, %s1832
                %s1972 = scalar_select %p1971, 0, %s1970
                %s1973 = smul.u32 %s1972, 512
                %s1974 = smul.u32 %s1972, 512
                %s1975 = scalar_lea.vmem %s1812, %s1973 [#allocation2]
                %s1976 = scalar_lea.vmem %s1823, %s1974
              $region61: #{generic_network_forward.1} parent=55 // loop_footer
                %s1836 = sadd.s32 %s1834, 1
              $region62: #{generic_network_forward.1} parent=55 // loop_footer_branch
                %1833 = sbr.rel target = $region58
              $region63: #{generic_network_forward.1} parent=55 // loop_exit
                _
              %s1977 = sshrl.u32 %s1819, 6
              %s1978 = sand.u32 %s1819, 63
              %s1979 = smul.u32 %s1977, 64
              %s1980 = smul.u32 8, %s1979
              %s1981 = scalar_lea.vmem %s1812, %s1980 [#allocation2]
              %s1982 = smul.u32 8, %s1979
              %s1983 = scalar_lea.vmem %s1823, %s1982
              // While loop
              $region64: #{generic_network_forward.1} parent=55 // loop_pre_header
                _
              $region65: #{generic_network_forward.1} parent=55 // loop_header
                %s1985 = sphi 0, %s1987
                %p1986 = scmp.ge.s32.totalorder %s1985, %s1978
                %s1990 = sphi 0, %s1997
                %s1991 = sphi %s1981, %s2000
                %s1992 = sphi %s1983, %s2001
              $region66: #{generic_network_forward.1} parent=55 // loop_header_branch
                %1989 = sbr.rel (%p1986) target = $region70
              $region67: #{generic_network_forward.1} parent=55 // loop_body
                %v1993 = vld [vmem:[%s1991] sm:$0xff]
                %1994 = vst [vmem:[%s1992] sm:$0xff] %v1993
                %s1995 = sadd.s32 1, %s1990
                %p1996 = scmp.ge.s32.totalorder %s1995, %s1978
                %s1997 = scalar_select %p1996, 0, %s1995
                %s1998 = smul.u32 %s1997, 8
                %s1999 = smul.u32 %s1997, 8
                %s2000 = scalar_lea.vmem %s1981, %s1998 [#allocation2]
                %s2001 = scalar_lea.vmem %s1983, %s1999
              $region68: #{generic_network_forward.1} parent=55 // loop_footer
                %s1987 = sadd.s32 %s1985, 1
              $region69: #{generic_network_forward.1} parent=55 // loop_footer_branch
                %1984 = sbr.rel target = $region65
              $region70: #{generic_network_forward.1} parent=55 // loop_exit
                _
            $region56: #{generic_network_forward.1} parent=47 // pred_fallthru
              _
          $region48: #{generic_network_forward.1} parent=43 // pred_fallthru
            _
          %2176 = vnop
        $region44: #{generic_network_forward.1} parent=39 // pred_fallthru
          _
      $region40: #{generic_network_forward.1} parent=5 // pred_fallthru
        _
      %p2177 = scmp.le.s32.totalorder 2, %s11
      // Predicated region
      $region93: #{generic_network_forward.1} parent=5 // pred_check
        %p2178 = pneg %p2177
      $region94: #{generic_network_forward.1} parent=5 // pred_check_branch
        %2180 = sbr.rel (%p2178) target = $region96
      $region95: #{generic_network_forward.1} parent=5 // pred_region
        %s2181 = ssub.s32 %s11, 2
        // Predicated region
        $region97: #{generic_network_forward.1} parent=95 // pred_check
          %p2182 = pneg %p150
        $region98: #{generic_network_forward.1} parent=95 // pred_check_branch
          %2184 = sbr.rel (%p2182) target = $region100
        $region99: #{generic_network_forward.1} parent=95 // pred_region
          %s2185 = sand.u32 %s135, 1
          %s2186 = sand.u32 %s135, 1
          %s2187 = smul.addr %s2186, 512
          %s2188 = scalar_lea.vmem [#allocation2], %s2187
        $region100: #{generic_network_forward.1} parent=95 // pred_fallthru
          _
      $region96: #{generic_network_forward.1} parent=5 // pred_fallthru
        _
    $region6: #{generic_network_forward.1} parent=1 // loop_footer
      %s15 = sadd.s32 1, %s11
    $region7: #{generic_network_forward.1} parent=1 // loop_footer_branch
      %10 = sbr.rel target = $region3
    $region8: #{generic_network_forward.1} parent=1 // loop_exit
      _

</llo_original>
